<compile_context>
chip_gen: v7x
topology: tpu7x:2x2x1
jax: 0.10.0
libtpu: 0.0.40
codegen_flags: <defaults>
</compile_context>

<pallas_src>
import jax
import jax.numpy as jnp
from jax.experimental import pallas as pl
from jax.experimental.pallas import tpu as pltpu


# ----------------------------------------------------------------------------
# Pallas kernel: full LSTM recurrence + concat(v_out, state) in one invocation.
# ----------------------------------------------------------------------------
def _lstm_concat_kernel(x_seq_ref,   # (T, D)   first v_margin CNN features
                        state_ref,   # (1, S)   the "x" passed to forward()
                        wih_ref,     # (D, 4H)  W_ih^T
                        whh_ref,     # (H, 4H)  W_hh^T
                        bias_ref,    # (1, 4H)  b_ih + b_hh
                        out_ref):    # (1, H+S)
    T = x_seq_ref.shape[0]
    H = whh_ref.shape[0]

    # Hoisted input projection: one (T, D) @ (D, 4H) MXU matmul + bias, done
    # once, off the serial recurrence critical path (all T rows in one push).
    xproj = (jnp.dot(x_seq_ref[...], wih_ref[...],
                     preferred_element_type=jnp.float32)
             + bias_ref[...])                                  # (T, 4H)

    whh = whh_ref[...]                                         # loaded once

    h = jnp.zeros((1, H), jnp.float32)
    c = jnp.zeros((1, H), jnp.float32)

    # T is a small static trip count: fully unrolled at trace time (keeps the
    # LLO scheduler's view of the whole recurrence).  Per step: one MXU matmul
    # on the serial chain, 2 EUP transcendental passes over the whole (1, 4H)
    # gates slab, then lane-aligned slices + VPU elementwise.
    for t in range(T):
        gates = xproj[t:t + 1, :] + jnp.dot(
            h, whh, preferred_element_type=jnp.float32)        # (1, 4H)
        sg = jax.nn.sigmoid(gates)      # one EUP pass (covers i, f, o lanes)
        th = jnp.tanh(gates)            # one EUP pass (covers g lanes)
        i_g = sg[:, 0 * H:1 * H]
        f_g = sg[:, 1 * H:2 * H]
        o_g = sg[:, 3 * H:4 * H]
        g_g = th[:, 2 * H:3 * H]
        c = f_g * c + i_g * g_g
        h = o_g * jnp.tanh(c)

    # out = torch.cat((v_out, x), dim=1) -- written as two direct stores.
    out_ref[:, :H] = h.astype(out_ref.dtype)
    out_ref[:, H:] = state_ref[...].astype(out_ref.dtype)


# ----------------------------------------------------------------------------
# Wrapper: builds the pallas_call (initialize + forward of VideoForecastNet).
# ----------------------------------------------------------------------------
def video_forecast_net_forward(cnn_feats, state_x, params, *, v_hdim, v_margin):
    """
    cnn_feats : (N, cnn_feat_dim)  -- the `x` passed to initialize() (test mode)
    state_x   : (1, state_dim)     -- the `x` passed to forward()  (s_net_type='id')
    returns   : (1, v_hdim + state_dim)
    """
    # initialize(): x.unsqueeze(1)[:v_margin] -> (T, 1, D); batch=1 squeezed.
    x_seq = cnn_feats[:v_margin].astype(jnp.float32)            # (T, D)
    S = state_x.shape[-1]
    H = v_hdim

    # Weight pre-transpose / bias fold happens once in the wrapper (XLA side),
    # never inside the kernel.
    wih_t = params["w_ih"].T.astype(jnp.float32)                # (D, 4H)
    whh_t = params["w_hh"].T.astype(jnp.float32)                # (H, 4H)
    bias = (params["b_ih"] + params["b_hh"])[None, :].astype(jnp.float32)

    vmem_spec = pl.BlockSpec(memory_space=pltpu.MemorySpace.VMEM)

    return pl.pallas_call(
        _lstm_concat_kernel,
        out_shape=jax.ShapeDtypeStruct((1, H + S), jnp.float32),
        in_specs=[vmem_spec, vmem_spec, vmem_spec, vmem_spec, vmem_spec],
        out_specs=vmem_spec,
        compiler_params=pltpu.CompilerParams(vmem_limit_bytes=32 * 1024 * 1024),
    )(x_seq, state_x.astype(jnp.float32), wih_t, whh_t, bias)


# ----------------------------------------------------------------------------
# Pure-JAX reference (sanity check of the recurrence semantics).
# ----------------------------------------------------------------------------
def _reference(cnn_feats, state_x, params, *, v_hdim, v_margin):
    x_seq = cnn_feats[:v_margin].astype(jnp.float32)   # (T, D)  (batch = 1)
    H = v_hdim
    w_ih, w_hh = params["w_ih"], params["w_hh"]
    b = params["b_ih"] + params["b_hh"]
    h = jnp.zeros((1, H), jnp.float32)
    c = jnp.zeros((1, H), jnp.float32)
    for t in range(x_seq.shape[0]):
        g = x_seq[t][None, :] @ w_ih.T + h @ w_hh.T + b[None, :]
        i = jax.nn.sigmoid(g[:, 0 * H:1 * H])
        f = jax.nn.sigmoid(g[:, 1 * H:2 * H])
        gg = jnp.tanh(g[:, 2 * H:3 * H])
        o = jax.nn.sigmoid(g[:, 3 * H:4 * H])
        c = f * c + i * gg
        h = o * jnp.tanh(c)
    return jnp.concatenate([h, state_x.astype(jnp.float32)], axis=-1)


if __name__ == "__main__":
    # Small, module-consistent sizes.  v_hdim=128 is the module default and
    # makes every in-kernel gate slice fall on a (8,128) tile boundary.
    cnn_feat_dim = 32
    state_dim = 16
    v_hdim = 128
    v_margin = 8
    n_frames = 12            # >= v_margin; initialize() slices the first v_margin

    key = jax.random.PRNGKey(0)
    k1, k2, k3, k4, k5, k6 = jax.random.split(key, 6)

    # Deterministic synthetic LSTMCell parameters (torch gate order i,f,g,o).
    scale = 1.0 / jnp.sqrt(jnp.float32(v_hdim))
    params = {
        "w_ih": jax.random.uniform(k1, (4 * v_hdim, cnn_feat_dim),
                                   jnp.float32, -scale, scale),
        "w_hh": jax.random.uniform(k2, (4 * v_hdim, v_hdim),
                                   jnp.float32, -scale, scale),
        "b_ih": jax.random.uniform(k3, (4 * v_hdim,), jnp.float32, -scale, scale),
        "b_hh": jax.random.uniform(k4, (4 * v_hdim,), jnp.float32, -scale, scale),
    }

    cnn_feats = jax.random.normal(k5, (n_frames, cnn_feat_dim), jnp.float32)
    state_x = jax.random.normal(k6, (1, state_dim), jnp.float32)

    out = video_forecast_net_forward(cnn_feats, state_x, params,
                                     v_hdim=v_hdim, v_margin=v_margin)
    out = jax.block_until_ready(out)

    ref = _reference(cnn_feats, state_x, params, v_hdim=v_hdim, v_margin=v_margin)
    assert out.shape == (1, v_hdim + state_dim), out.shape
    assert jnp.allclose(out, ref, atol=1e-5, rtol=1e-5), \
        f"max err {jnp.max(jnp.abs(out - ref))}"

    # TODO(synk): the 'train'-mode host-side numpy episode bookkeeping
    # (scatter/gather index surgery in initialize()) and the optional
    # s_net_type='lstm' / v_net_type='tcn' variants are not reproduced; only
    # the default test-mode forward path (lstm v_net + identity s_net) is
    # implemented in the kernel.
    print("KERNEL_OK")
</pallas_src>

<mosaic_0001>
module attributes {stable_mosaic.version = 11 : i64} {
  func.func @_lstm_concat_kernel(%arg0: memref<8x32xf32, #tpu.memory_space<vmem>>, %arg1: memref<1x16xf32, #tpu.memory_space<vmem>>, %arg2: memref<32x512xf32, #tpu.memory_space<vmem>>, %arg3: memref<128x512xf32, #tpu.memory_space<vmem>>, %arg4: memref<1x512xf32, #tpu.memory_space<vmem>>, %arg5: memref<1x144xf32, #tpu.memory_space<vmem>>) attributes {dimension_semantics = [], scalar_prefetch = 0 : i64, scratch_operands = 0 : i64, tpu.core_type = #tpu.core_type<tc>} {
    %c0 = arith.constant 0 : index
    %c0_0 = arith.constant 0 : index
    %0 = vector.load %arg0[%c0, %c0_0] : memref<8x32xf32, #tpu.memory_space<vmem>>, vector<8x32xf32>
    %c0_1 = arith.constant 0 : index
    %c0_2 = arith.constant 0 : index
    %1 = vector.load %arg2[%c0_1, %c0_2] : memref<32x512xf32, #tpu.memory_space<vmem>>, vector<32x512xf32>
    %cst = arith.constant dense<0.000000e+00> : vector<8x512xf32>
    %2 = tpu.matmul %0, %1, %cst {dimension_numbers = #tpu.dot_dimension_numbers<[1], [0], [0], [1], [0, 0, 1, 1], [], []>} : vector<8x32xf32>, vector<32x512xf32>, vector<8x512xf32> -> vector<8x512xf32>
    %c0_3 = arith.constant 0 : index
    %c0_4 = arith.constant 0 : index
    %3 = vector.load %arg4[%c0_3, %c0_4] : memref<1x512xf32, #tpu.memory_space<vmem>>, vector<1x512xf32>
    %4 = vector.broadcast %3 : vector<1x512xf32> to vector<8x512xf32>
    %5 = arith.addf %2, %4 : vector<8x512xf32>
    %c0_5 = arith.constant 0 : index
    %c0_6 = arith.constant 0 : index
    %6 = vector.load %arg3[%c0_5, %c0_6] : memref<128x512xf32, #tpu.memory_space<vmem>>, vector<128x512xf32>
    %cst_7 = arith.constant 0.000000e+00 : f32
    %7 = vector.broadcast %cst_7 : f32 to vector<1x128xf32>
    %cst_8 = arith.constant 0.000000e+00 : f32
    %8 = vector.broadcast %cst_8 : f32 to vector<1x128xf32>
    %9 = vector.extract_strided_slice %5 {offsets = [0, 0], sizes = [1, 512], strides = [1, 1]} : vector<8x512xf32> to vector<1x512xf32>
    %cst_9 = arith.constant dense<0.000000e+00> : vector<1x512xf32>
    %10 = tpu.matmul %7, %6, %cst_9 {dimension_numbers = #tpu.dot_dimension_numbers<[1], [0], [0], [1], [0, 0, 1, 1], [], []>} : vector<1x128xf32>, vector<128x512xf32>, vector<1x512xf32> -> vector<1x512xf32>
    %11 = arith.addf %9, %10 : vector<1x512xf32>
    %12 = arith.negf %11 : vector<1x512xf32>
    %13 = math.exp %12 : vector<1x512xf32>
    %cst_10 = arith.constant 1.000000e+00 : f32
    %14 = vector.broadcast %cst_10 : f32 to vector<1x512xf32>
    %15 = arith.addf %14, %13 : vector<1x512xf32>
    %16 = arith.divf %14, %15 : vector<1x512xf32>
    %17 = math.tanh %11 : vector<1x512xf32>
    %18 = vector.extract_strided_slice %16 {offsets = [0, 0], sizes = [1, 128], strides = [1, 1]} : vector<1x512xf32> to vector<1x128xf32>
    %19 = vector.extract_strided_slice %16 {offsets = [0, 128], sizes = [1, 128], strides = [1, 1]} : vector<1x512xf32> to vector<1x128xf32>
    %20 = vector.extract_strided_slice %16 {offsets = [0, 384], sizes = [1, 128], strides = [1, 1]} : vector<1x512xf32> to vector<1x128xf32>
    %21 = vector.extract_strided_slice %17 {offsets = [0, 256], sizes = [1, 128], strides = [1, 1]} : vector<1x512xf32> to vector<1x128xf32>
    %22 = arith.mulf %19, %8 : vector<1x128xf32>
    %23 = arith.mulf %18, %21 : vector<1x128xf32>
    %24 = arith.addf %22, %23 : vector<1x128xf32>
    %25 = math.tanh %24 : vector<1x128xf32>
    %26 = arith.mulf %20, %25 : vector<1x128xf32>
    %27 = vector.extract_strided_slice %5 {offsets = [1, 0], sizes = [1, 512], strides = [1, 1]} : vector<8x512xf32> to vector<1x512xf32>
    %cst_11 = arith.constant dense<0.000000e+00> : vector<1x512xf32>
    %28 = tpu.matmul %26, %6, %cst_11 {dimension_numbers = #tpu.dot_dimension_numbers<[1], [0], [0], [1], [0, 0, 1, 1], [], []>} : vector<1x128xf32>, vector<128x512xf32>, vector<1x512xf32> -> vector<1x512xf32>
    %29 = arith.addf %27, %28 : vector<1x512xf32>
    %30 = arith.negf %29 : vector<1x512xf32>
    %31 = math.exp %30 : vector<1x512xf32>
    %cst_12 = arith.constant 1.000000e+00 : f32
    %32 = vector.broadcast %cst_12 : f32 to vector<1x512xf32>
    %33 = arith.addf %32, %31 : vector<1x512xf32>
    %34 = arith.divf %32, %33 : vector<1x512xf32>
    %35 = math.tanh %29 : vector<1x512xf32>
    %36 = vector.extract_strided_slice %34 {offsets = [0, 0], sizes = [1, 128], strides = [1, 1]} : vector<1x512xf32> to vector<1x128xf32>
    %37 = vector.extract_strided_slice %34 {offsets = [0, 128], sizes = [1, 128], strides = [1, 1]} : vector<1x512xf32> to vector<1x128xf32>
    %38 = vector.extract_strided_slice %34 {offsets = [0, 384], sizes = [1, 128], strides = [1, 1]} : vector<1x512xf32> to vector<1x128xf32>
    %39 = vector.extract_strided_slice %35 {offsets = [0, 256], sizes = [1, 128], strides = [1, 1]} : vector<1x512xf32> to vector<1x128xf32>
    %40 = arith.mulf %37, %24 : vector<1x128xf32>
    %41 = arith.mulf %36, %39 : vector<1x128xf32>
    %42 = arith.addf %40, %41 : vector<1x128xf32>
    %43 = math.tanh %42 : vector<1x128xf32>
    %44 = arith.mulf %38, %43 : vector<1x128xf32>
    %45 = vector.extract_strided_slice %5 {offsets = [2, 0], sizes = [1, 512], strides = [1, 1]} : vector<8x512xf32> to vector<1x512xf32>
    %cst_13 = arith.constant dense<0.000000e+00> : vector<1x512xf32>
    %46 = tpu.matmul %44, %6, %cst_13 {dimension_numbers = #tpu.dot_dimension_numbers<[1], [0], [0], [1], [0, 0, 1, 1], [], []>} : vector<1x128xf32>, vector<128x512xf32>, vector<1x512xf32> -> vector<1x512xf32>
    %47 = arith.addf %45, %46 : vector<1x512xf32>
    %48 = arith.negf %47 : vector<1x512xf32>
    %49 = math.exp %48 : vector<1x512xf32>
    %cst_14 = arith.constant 1.000000e+00 : f32
    %50 = vector.broadcast %cst_14 : f32 to vector<1x512xf32>
    %51 = arith.addf %50, %49 : vector<1x512xf32>
    %52 = arith.divf %50, %51 : vector<1x512xf32>
    %53 = math.tanh %47 : vector<1x512xf32>
    %54 = vector.extract_strided_slice %52 {offsets = [0, 0], sizes = [1, 128], strides = [1, 1]} : vector<1x512xf32> to vector<1x128xf32>
    %55 = vector.extract_strided_slice %52 {offsets = [0, 128], sizes = [1, 128], strides = [1, 1]} : vector<1x512xf32> to vector<1x128xf32>
    %56 = vector.extract_strided_slice %52 {offsets = [0, 384], sizes = [1, 128], strides = [1, 1]} : vector<1x512xf32> to vector<1x128xf32>
    %57 = vector.extract_strided_slice %53 {offsets = [0, 256], sizes = [1, 128], strides = [1, 1]} : vector<1x512xf32> to vector<1x128xf32>
    %58 = arith.mulf %55, %42 : vector<1x128xf32>
    %59 = arith.mulf %54, %57 : vector<1x128xf32>
    %60 = arith.addf %58, %59 : vector<1x128xf32>
    %61 = math.tanh %60 : vector<1x128xf32>
    %62 = arith.mulf %56, %61 : vector<1x128xf32>
    %63 = vector.extract_strided_slice %5 {offsets = [3, 0], sizes = [1, 512], strides = [1, 1]} : vector<8x512xf32> to vector<1x512xf32>
    %cst_15 = arith.constant dense<0.000000e+00> : vector<1x512xf32>
    %64 = tpu.matmul %62, %6, %cst_15 {dimension_numbers = #tpu.dot_dimension_numbers<[1], [0], [0], [1], [0, 0, 1, 1], [], []>} : vector<1x128xf32>, vector<128x512xf32>, vector<1x512xf32> -> vector<1x512xf32>
    %65 = arith.addf %63, %64 : vector<1x512xf32>
    %66 = arith.negf %65 : vector<1x512xf32>
    %67 = math.exp %66 : vector<1x512xf32>
    %cst_16 = arith.constant 1.000000e+00 : f32
    %68 = vector.broadcast %cst_16 : f32 to vector<1x512xf32>
    %69 = arith.addf %68, %67 : vector<1x512xf32>
    %70 = arith.divf %68, %69 : vector<1x512xf32>
    %71 = math.tanh %65 : vector<1x512xf32>
    %72 = vector.extract_strided_slice %70 {offsets = [0, 0], sizes = [1, 128], strides = [1, 1]} : vector<1x512xf32> to vector<1x128xf32>
    %73 = vector.extract_strided_slice %70 {offsets = [0, 128], sizes = [1, 128], strides = [1, 1]} : vector<1x512xf32> to vector<1x128xf32>
    %74 = vector.extract_strided_slice %70 {offsets = [0, 384], sizes = [1, 128], strides = [1, 1]} : vector<1x512xf32> to vector<1x128xf32>
    %75 = vector.extract_strided_slice %71 {offsets = [0, 256], sizes = [1, 128], strides = [1, 1]} : vector<1x512xf32> to vector<1x128xf32>
    %76 = arith.mulf %73, %60 : vector<1x128xf32>
    %77 = arith.mulf %72, %75 : vector<1x128xf32>
    %78 = arith.addf %76, %77 : vector<1x128xf32>
    %79 = math.tanh %78 : vector<1x128xf32>
    %80 = arith.mulf %74, %79 : vector<1x128xf32>
    %81 = vector.extract_strided_slice %5 {offsets = [4, 0], sizes = [1, 512], strides = [1, 1]} : vector<8x512xf32> to vector<1x512xf32>
    %cst_17 = arith.constant dense<0.000000e+00> : vector<1x512xf32>
    %82 = tpu.matmul %80, %6, %cst_17 {dimension_numbers = #tpu.dot_dimension_numbers<[1], [0], [0], [1], [0, 0, 1, 1], [], []>} : vector<1x128xf32>, vector<128x512xf32>, vector<1x512xf32> -> vector<1x512xf32>
    %83 = arith.addf %81, %82 : vector<1x512xf32>
    %84 = arith.negf %83 : vector<1x512xf32>
    %85 = math.exp %84 : vector<1x512xf32>
    %cst_18 = arith.constant 1.000000e+00 : f32
    %86 = vector.broadcast %cst_18 : f32 to vector<1x512xf32>
    %87 = arith.addf %86, %85 : vector<1x512xf32>
    %88 = arith.divf %86, %87 : vector<1x512xf32>
    %89 = math.tanh %83 : vector<1x512xf32>
    %90 = vector.extract_strided_slice %88 {offsets = [0, 0], sizes = [1, 128], strides = [1, 1]} : vector<1x512xf32> to vector<1x128xf32>
    %91 = vector.extract_strided_slice %88 {offsets = [0, 128], sizes = [1, 128], strides = [1, 1]} : vector<1x512xf32> to vector<1x128xf32>
    %92 = vector.extract_strided_slice %88 {offsets = [0, 384], sizes = [1, 128], strides = [1, 1]} : vector<1x512xf32> to vector<1x128xf32>
    %93 = vector.extract_strided_slice %89 {offsets = [0, 256], sizes = [1, 128], strides = [1, 1]} : vector<1x512xf32> to vector<1x128xf32>
    %94 = arith.mulf %91, %78 : vector<1x128xf32>
    %95 = arith.mulf %90, %93 : vector<1x128xf32>
    %96 = arith.addf %94, %95 : vector<1x128xf32>
    %97 = math.tanh %96 : vector<1x128xf32>
    %98 = arith.mulf %92, %97 : vector<1x128xf32>
    %99 = vector.extract_strided_slice %5 {offsets = [5, 0], sizes = [1, 512], strides = [1, 1]} : vector<8x512xf32> to vector<1x512xf32>
    %cst_19 = arith.constant dense<0.000000e+00> : vector<1x512xf32>
    %100 = tpu.matmul %98, %6, %cst_19 {dimension_numbers = #tpu.dot_dimension_numbers<[1], [0], [0], [1], [0, 0, 1, 1], [], []>} : vector<1x128xf32>, vector<128x512xf32>, vector<1x512xf32> -> vector<1x512xf32>
    %101 = arith.addf %99, %100 : vector<1x512xf32>
    %102 = arith.negf %101 : vector<1x512xf32>
    %103 = math.exp %102 : vector<1x512xf32>
    %cst_20 = arith.constant 1.000000e+00 : f32
    %104 = vector.broadcast %cst_20 : f32 to vector<1x512xf32>
    %105 = arith.addf %104, %103 : vector<1x512xf32>
    %106 = arith.divf %104, %105 : vector<1x512xf32>
    %107 = math.tanh %101 : vector<1x512xf32>
    %108 = vector.extract_strided_slice %106 {offsets = [0, 0], sizes = [1, 128], strides = [1, 1]} : vector<1x512xf32> to vector<1x128xf32>
    %109 = vector.extract_strided_slice %106 {offsets = [0, 128], sizes = [1, 128], strides = [1, 1]} : vector<1x512xf32> to vector<1x128xf32>
    %110 = vector.extract_strided_slice %106 {offsets = [0, 384], sizes = [1, 128], strides = [1, 1]} : vector<1x512xf32> to vector<1x128xf32>
    %111 = vector.extract_strided_slice %107 {offsets = [0, 256], sizes = [1, 128], strides = [1, 1]} : vector<1x512xf32> to vector<1x128xf32>
    %112 = arith.mulf %109, %96 : vector<1x128xf32>
    %113 = arith.mulf %108, %111 : vector<1x128xf32>
    %114 = arith.addf %112, %113 : vector<1x128xf32>
    %115 = math.tanh %114 : vector<1x128xf32>
    %116 = arith.mulf %110, %115 : vector<1x128xf32>
    %117 = vector.extract_strided_slice %5 {offsets = [6, 0], sizes = [1, 512], strides = [1, 1]} : vector<8x512xf32> to vector<1x512xf32>
    %cst_21 = arith.constant dense<0.000000e+00> : vector<1x512xf32>
    %118 = tpu.matmul %116, %6, %cst_21 {dimension_numbers = #tpu.dot_dimension_numbers<[1], [0], [0], [1], [0, 0, 1, 1], [], []>} : vector<1x128xf32>, vector<128x512xf32>, vector<1x512xf32> -> vector<1x512xf32>
    %119 = arith.addf %117, %118 : vector<1x512xf32>
    %120 = arith.negf %119 : vector<1x512xf32>
    %121 = math.exp %120 : vector<1x512xf32>
    %cst_22 = arith.constant 1.000000e+00 : f32
    %122 = vector.broadcast %cst_22 : f32 to vector<1x512xf32>
    %123 = arith.addf %122, %121 : vector<1x512xf32>
    %124 = arith.divf %122, %123 : vector<1x512xf32>
    %125 = math.tanh %119 : vector<1x512xf32>
    %126 = vector.extract_strided_slice %124 {offsets = [0, 0], sizes = [1, 128], strides = [1, 1]} : vector<1x512xf32> to vector<1x128xf32>
    %127 = vector.extract_strided_slice %124 {offsets = [0, 128], sizes = [1, 128], strides = [1, 1]} : vector<1x512xf32> to vector<1x128xf32>
    %128 = vector.extract_strided_slice %124 {offsets = [0, 384], sizes = [1, 128], strides = [1, 1]} : vector<1x512xf32> to vector<1x128xf32>
    %129 = vector.extract_strided_slice %125 {offsets = [0, 256], sizes = [1, 128], strides = [1, 1]} : vector<1x512xf32> to vector<1x128xf32>
    %130 = arith.mulf %127, %114 : vector<1x128xf32>
    %131 = arith.mulf %126, %129 : vector<1x128xf32>
    %132 = arith.addf %130, %131 : vector<1x128xf32>
    %133 = math.tanh %132 : vector<1x128xf32>
    %134 = arith.mulf %128, %133 : vector<1x128xf32>
    %135 = vector.extract_strided_slice %5 {offsets = [7, 0], sizes = [1, 512], strides = [1, 1]} : vector<8x512xf32> to vector<1x512xf32>
    %cst_23 = arith.constant dense<0.000000e+00> : vector<1x512xf32>
    %136 = tpu.matmul %134, %6, %cst_23 {dimension_numbers = #tpu.dot_dimension_numbers<[1], [0], [0], [1], [0, 0, 1, 1], [], []>} : vector<1x128xf32>, vector<128x512xf32>, vector<1x512xf32> -> vector<1x512xf32>
    %137 = arith.addf %135, %136 : vector<1x512xf32>
    %138 = arith.negf %137 : vector<1x512xf32>
    %139 = math.exp %138 : vector<1x512xf32>
    %cst_24 = arith.constant 1.000000e+00 : f32
    %140 = vector.broadcast %cst_24 : f32 to vector<1x512xf32>
    %141 = arith.addf %140, %139 : vector<1x512xf32>
    %142 = arith.divf %140, %141 : vector<1x512xf32>
    %143 = math.tanh %137 : vector<1x512xf32>
    %144 = vector.extract_strided_slice %142 {offsets = [0, 0], sizes = [1, 128], strides = [1, 1]} : vector<1x512xf32> to vector<1x128xf32>
    %145 = vector.extract_strided_slice %142 {offsets = [0, 128], sizes = [1, 128], strides = [1, 1]} : vector<1x512xf32> to vector<1x128xf32>
    %146 = vector.extract_strided_slice %142 {offsets = [0, 384], sizes = [1, 128], strides = [1, 1]} : vector<1x512xf32> to vector<1x128xf32>
    %147 = vector.extract_strided_slice %143 {offsets = [0, 256], sizes = [1, 128], strides = [1, 1]} : vector<1x512xf32> to vector<1x128xf32>
    %148 = arith.mulf %145, %132 : vector<1x128xf32>
    %149 = arith.mulf %144, %147 : vector<1x128xf32>
    %150 = arith.addf %148, %149 : vector<1x128xf32>
    %151 = math.tanh %150 : vector<1x128xf32>
    %152 = arith.mulf %146, %151 : vector<1x128xf32>
    %c0_25 = arith.constant 0 : index
    %c0_26 = arith.constant 0 : index
    %153 = vector.load %arg5[%c0_25, %c0_26] : memref<1x144xf32, #tpu.memory_space<vmem>>, vector<1x128xf32>
    tpu.vector_store %arg5[%c0_25, %c0_26], %152 {strides = array<i32>} : memref<1x144xf32, #tpu.memory_space<vmem>>, vector<1x128xf32>,
    %c0_27 = arith.constant 0 : index
    %c0_28 = arith.constant 0 : index
    %154 = vector.load %arg1[%c0_27, %c0_28] : memref<1x16xf32, #tpu.memory_space<vmem>>, vector<1x16xf32>
    %c0_29 = arith.constant 0 : index
    %c128 = arith.constant 128 : index
    %155 = vector.load %arg5[%c0_29, %c128] : memref<1x144xf32, #tpu.memory_space<vmem>>, vector<1x16xf32>
    tpu.vector_store %arg5[%c0_29, %c128], %154 {strides = array<i32>} : memref<1x144xf32, #tpu.memory_space<vmem>>, vector<1x16xf32>,
    return
  }
}

</mosaic_0001>

<llo_original>
// kernel: tpu_custom_call.1
$region0: #{tpu_custom_call.1}
  #allocation0 [shape = 'u32[]', space=smem, size = 0x4, offset = 0x4, fixed_abs, tag = 'smem constant byte address 0x4 - core index']
  #allocation1 [shape = 'u32[144,128]{1,0:T(1,128)}', space=vmem, size = 0x12000, scoped, tag = 'internal scratch']
  %s0 = inlined_call_operand.hbm [shape: f32[8,32], index: 0, kind: input, shape index: {}]
  %s1 = inlined_call_operand.vmem [shape: f32[1,16], index: 1, kind: input, shape index: {}]
  %s2 = inlined_call_operand.hbm [shape: f32[32,512], index: 2, kind: input, shape index: {}]
  %s3 = inlined_call_operand.hbm [shape: f32[128,512], index: 3, kind: input, shape index: {}]
  %s4 = inlined_call_operand.vmem [shape: f32[1,512], index: 4, kind: input, shape index: {}]
  %s5 = inlined_call_operand.hbm [shape: f32[1,144], index: 5, kind: output, shape index: {}]
  %s6 = sld [smem:[#allocation0]]
  $region42: #{tpu_custom_call.1} parent=0
    _
  %s8 = ssub.s32 1, %s6
  %s9 = scalar_select 0, %s8, %s6
  $region1: #{tpu_custom_call.1} parent=0
    #allocation2 [shape = 'u8[4096]{0}', space=vmem, size = 0x1000, scoped, tag = 'input window, operand 0, single buffered']
    #allocation3 [shape = 's32[1]{0}', space=sflag, size = 0x4, scoped, tag = 'scoped memory for tpu_custom_call.1']
    #allocation4 [shape = 's32[1]{0}', space=sflag, size = 0x4, scoped, tag = 'scoped memory for tpu_custom_call.1']
    #allocation5 [shape = 'u8[65536]{0}', space=vmem, size = 0x10000, scoped, tag = 'input window, operand 2, single buffered']
    #allocation6 [shape = 's32[1]{0}', space=sflag, size = 0x4, scoped, tag = 'scoped memory for tpu_custom_call.1']
    #allocation7 [shape = 'u8[262144]{0}', space=vmem, size = 0x40000, scoped, tag = 'input window, operand 3, single buffered']
    #allocation8 [shape = 'u8[1024]{0}', space=vmem, size = 0x400, scoped, tag = 'output window, operand 0, single buffered']
    %10 = vsyncpa [#allocation3], 0
    %11 = vsyncpa [#allocation6], 0
    %12 = vsyncpa [#allocation4], 0
    // Predicated region
    $region2: #{tpu_custom_call.1} parent=1 // pred_check
      _
    $region3: #{tpu_custom_call.1} parent=1 // pred_check_branch
      %14 = sbr.rel (0) target = $region5
    $region4: #{tpu_custom_call.1} parent=1 // pred_region
      %s16 = ssub.s32 128, 128
      %17 = vsyncadd [#allocation3], %s16
      %s19 = sshll.u32 [#allocation2], 4
      %s20 = int_to_ptr.vmem [resolvable:$true] %s19
      %22 = dma.hbm_to_vmem [thread:$0]  %s0, 128, %s20, [#allocation3]
    $region5: #{tpu_custom_call.1} parent=1 // pred_fallthru
      _
    // Predicated region
    $region6: #{tpu_custom_call.1} parent=1 // pred_check
      _
    $region7: #{tpu_custom_call.1} parent=1 // pred_check_branch
      %24 = sbr.rel (0) target = $region9
    $region8: #{tpu_custom_call.1} parent=1 // pred_region
      _
    $region9: #{tpu_custom_call.1} parent=1 // pred_fallthru
      _
    // Predicated region
    $region10: #{tpu_custom_call.1} parent=1 // pred_check
      _
    $region11: #{tpu_custom_call.1} parent=1 // pred_check_branch
      %26 = sbr.rel (0) target = $region13
    $region12: #{tpu_custom_call.1} parent=1 // pred_region
      %s28 = ssub.s32 2048, 2048
      %29 = vsyncadd [#allocation6], %s28
      %s30 = sshll.u32 [#allocation5], 4
      %s31 = int_to_ptr.vmem [resolvable:$true] %s30
      %36 = dma.hbm_to_vmem [thread:$0]  %s2, 2048, %s31, [#allocation6], 512, 512, 32
    $region13: #{tpu_custom_call.1} parent=1 // pred_fallthru
      _
    // Predicated region
    $region14: #{tpu_custom_call.1} parent=1 // pred_check
      _
    $region15: #{tpu_custom_call.1} parent=1 // pred_check_branch
      %38 = sbr.rel (0) target = $region17
    $region16: #{tpu_custom_call.1} parent=1 // pred_region
      %s40 = ssub.s32 8192, 8192
      %41 = vsyncadd [#allocation6], %s40
      %s42 = sshll.u32 [#allocation7], 4
      %s43 = int_to_ptr.vmem [resolvable:$true] %s42
      %48 = dma.hbm_to_vmem [thread:$0]  %s3, 8192, %s43, [#allocation6], 512, 512, 32
    $region17: #{tpu_custom_call.1} parent=1 // pred_fallthru
      _
    // Predicated region
    $region18: #{tpu_custom_call.1} parent=1 // pred_check
      _
    $region19: #{tpu_custom_call.1} parent=1 // pred_check_branch
      %50 = sbr.rel (0) target = $region21
    $region20: #{tpu_custom_call.1} parent=1 // pred_region
      _
    $region21: #{tpu_custom_call.1} parent=1 // pred_fallthru
      _
    // Predicated region
    $region22: #{tpu_custom_call.1} parent=1 // pred_check
      _
    $region23: #{tpu_custom_call.1} parent=1 // pred_check_branch
      %52 = sbr.rel (0) target = $region25
    $region24: #{tpu_custom_call.1} parent=1 // pred_region
      %53 = dma.done [#allocation3], 128
    $region25: #{tpu_custom_call.1} parent=1 // pred_fallthru
      _
    // Predicated region
    $region26: #{tpu_custom_call.1} parent=1 // pred_check
      _
    $region27: #{tpu_custom_call.1} parent=1 // pred_check_branch
      %55 = sbr.rel (0) target = $region29
    $region28: #{tpu_custom_call.1} parent=1 // pred_region
      %56 = dma.done [#allocation6], 2048
    $region29: #{tpu_custom_call.1} parent=1 // pred_fallthru
      _
    // Predicated region
    $region30: #{tpu_custom_call.1} parent=1 // pred_check
      _
    $region31: #{tpu_custom_call.1} parent=1 // pred_check_branch
      %58 = sbr.rel (0) target = $region33
    $region32: #{tpu_custom_call.1} parent=1 // pred_region
      %59 = dma.done [#allocation6], 8192
    $region33: #{tpu_custom_call.1} parent=1 // pred_fallthru
      _
    %v60 = vld [vmem:[#allocation2] sm:$0xff]
    %v61 = vld [vmem:[#allocation5] sm:$0xff]
    %v62 = vld [vmem:[#allocation5 + $0x8] sm:$0xff]
    %v63 = vld [vmem:[#allocation5 + $0x10] sm:$0xff]
    %v64 = vld [vmem:[#allocation5 + $0x18] sm:$0xff]
    %v65 = vld [vmem:[#allocation5 + $0x20] sm:$0xff]
    %v66 = vld [vmem:[#allocation5 + $0x28] sm:$0xff]
    %v67 = vld [vmem:[#allocation5 + $0x30] sm:$0xff]
    %v68 = vld [vmem:[#allocation5 + $0x38] sm:$0xff]
    %v69 = vld [vmem:[#allocation5 + $0x40] sm:$0xff]
    %v70 = vld [vmem:[#allocation5 + $0x48] sm:$0xff]
    %v71 = vld [vmem:[#allocation5 + $0x50] sm:$0xff]
    %v72 = vld [vmem:[#allocation5 + $0x58] sm:$0xff]
    %v73 = vld [vmem:[#allocation5 + $0x60] sm:$0xff]
    %v74 = vld [vmem:[#allocation5 + $0x68] sm:$0xff]
    %v75 = vld [vmem:[#allocation5 + $0x70] sm:$0xff]
    %v76 = vld [vmem:[#allocation5 + $0x78] sm:$0xff]
    %v77 = vld [vmem:[%s4] sm:$0xf]
    %v79 = vlaneseq
    %v80 = vshrl.u32 %v79, 7
    %v81 = vsub.s32 0, %v80
    %v82 = vrot.slane %v77, %v81
    %v83 = vlaneseq
    %v84 = vshrl.u32 %v83, 7
    %v85 = vsub.s32 1, %v84
    %v86 = vrot.slane %v77, %v85
    %v87 = vlaneseq
    %v88 = vshrl.u32 %v87, 7
    %v89 = vsub.s32 2, %v88
    %v90 = vrot.slane %v77, %v89
    %v91 = vlaneseq
    %v92 = vshrl.u32 %v91, 7
    %v93 = vsub.s32 3, %v92
    %v94 = vrot.slane %v77, %v93
    %vm99 = vcmask 261120
    %v101 = vsel %vm99, %v60, 0
    %103 = vmatprep.subr.mxu0 %v62
    %104 = vmatpush1.msra.mxu0 %v61
    %105 = vmatprep.subr.mxu0 %v66
    %106 = vmatpush1.msra.mxu0 %v65
    %107 = vmatprep.subr.mxu0 %v70
    %108 = vmatpush1.msra.mxu0 %v69
    %109 = vmatprep.subr.mxu0 %v74
    %110 = vmatpush1.msra.mxu0 %v73
    %111 = vmatprep.subr.mxu0 0.0
    %112 = vmatpush1.msra.mxu0 0.0
    %113 = vmatprep.subr.mxu0 0.0
    %114 = vmatpush1.msra.mxu0 0.0
    %115 = vmatprep.subr.mxu0 0.0
    %116 = vmatpush1.msra.mxu0 0.0
    %117 = vmatprep.subr.mxu0 0.0
    %118 = vmatpush1.msra.mxu0 0.0
    %119 = vmatprep.subr.mxu0 0.0
    %120 = vmatpush1.msra.mxu0 0.0
    %121 = vmatprep.subr.mxu0 0.0
    %122 = vmatpush1.msra.mxu0 0.0
    %123 = vmatprep.subr.mxu0 0.0
    %124 = vmatpush1.msra.mxu0 0.0
    %125 = vmatprep.subr.mxu0 0.0
    %126 = vmatpush1.msra.mxu0 0.0
    %127 = vmatprep.subr.mxu0 0.0
    %128 = vmatpush1.msra.mxu0 0.0
    %129 = vmatprep.subr.mxu0 0.0
    %130 = vmatpush1.msra.mxu0 0.0
    %131 = vmatprep.subr.mxu0 0.0
    %132 = vmatpush1.msra.mxu0 0.0
    %133 = vmatprep.subr.mxu0 0.0
    %134 = vmatpush1.msra.mxu0 0.0
    %135 = vmatprep.subr.mxu0 0.0
    %136 = vmatpush1.msra.mxu0 0.0
    %137 = vmatprep.subr.mxu0 0.0
    %138 = vmatpush1.msra.mxu0 0.0
    %139 = vmatprep.subr.mxu0 0.0
    %140 = vmatpush1.msra.mxu0 0.0
    %141 = vmatprep.subr.mxu0 0.0
    %142 = vmatpush1.msra.mxu0 0.0
    %143 = vmatprep.subr.mxu0 0.0
    %144 = vmatpush1.msra.mxu0 0.0
    %145 = vmatprep.subr.mxu0 0.0
    %146 = vmatpush1.msra.mxu0 0.0
    %147 = vmatprep.subr.mxu0 0.0
    %148 = vmatpush1.msra.mxu0 0.0
    %149 = vmatprep.subr.mxu0 0.0
    %150 = vmatpush1.msra.mxu0 0.0
    %151 = vmatprep.subr.mxu0 0.0
    %152 = vmatpush1.msra.mxu0 0.0
    %153 = vmatprep.subr.mxu0 0.0
    %154 = vmatpush1.msra.mxu0 0.0
    %155 = vmatprep.subr.mxu0 0.0
    %156 = vmatpush1.msra.mxu0 0.0
    %157 = vmatprep.subr.mxu0 0.0
    %158 = vmatpush1.msra.mxu0 0.0
    %159 = vmatprep.subr.mxu0 0.0
    %160 = vmatpush1.msra.mxu0 0.0
    %161 = vmatprep.subr.mxu0 0.0
    %162 = vmatpush1.msra.mxu0 0.0
    %163 = vmatprep.subr.mxu0 0.0
    %164 = vmatpush1.msra.mxu0 0.0
    %165 = vmatprep.subr.mxu0 0.0
    %166 = vmatpush1.msra.mxu0 0.0
    %167 = vmatprep.mubr.f32.mxu0 0.0
    %168 = vmatmul.mubr.f32.gmra.mrb[0].mxu0 %v101
    %v169 = vpop.f32.mrb[0].mxu0
    %v170 = vadd.f32 %v82, %v169
    %v171 = vpop.f32.mrb[0].mxu0
    %v172 = vadd.f32 %v86, %v171
    %173 = vdwg.mxu0
    %174 = vmatprep.subr.mxu0 %v64
    %175 = vmatpush1.msra.mxu0 %v63
    %176 = vmatprep.subr.mxu0 %v68
    %177 = vmatpush1.msra.mxu0 %v67
    %178 = vmatprep.subr.mxu0 %v72
    %179 = vmatpush1.msra.mxu0 %v71
    %180 = vmatprep.subr.mxu0 %v76
    %181 = vmatpush1.msra.mxu0 %v75
    %182 = vmatprep.subr.mxu0 0.0
    %183 = vmatpush1.msra.mxu0 0.0
    %184 = vmatprep.subr.mxu0 0.0
    %185 = vmatpush1.msra.mxu0 0.0
    %186 = vmatprep.subr.mxu0 0.0
    %187 = vmatpush1.msra.mxu0 0.0
    %188 = vmatprep.subr.mxu0 0.0
    %189 = vmatpush1.msra.mxu0 0.0
    %190 = vmatprep.subr.mxu0 0.0
    %191 = vmatpush1.msra.mxu0 0.0
    %192 = vmatprep.subr.mxu0 0.0
    %193 = vmatpush1.msra.mxu0 0.0
    %194 = vmatprep.subr.mxu0 0.0
    %195 = vmatpush1.msra.mxu0 0.0
    %196 = vmatprep.subr.mxu0 0.0
    %197 = vmatpush1.msra.mxu0 0.0
    %198 = vmatprep.subr.mxu0 0.0
    %199 = vmatpush1.msra.mxu0 0.0
    %200 = vmatprep.subr.mxu0 0.0
    %201 = vmatpush1.msra.mxu0 0.0
    %202 = vmatprep.subr.mxu0 0.0
    %203 = vmatpush1.msra.mxu0 0.0
    %204 = vmatprep.subr.mxu0 0.0
    %205 = vmatpush1.msra.mxu0 0.0
    %206 = vmatprep.subr.mxu0 0.0
    %207 = vmatpush1.msra.mxu0 0.0
    %208 = vmatprep.subr.mxu0 0.0
    %209 = vmatpush1.msra.mxu0 0.0
    %210 = vmatprep.subr.mxu0 0.0
    %211 = vmatpush1.msra.mxu0 0.0
    %212 = vmatprep.subr.mxu0 0.0
    %213 = vmatpush1.msra.mxu0 0.0
    %214 = vmatprep.subr.mxu0 0.0
    %215 = vmatpush1.msra.mxu0 0.0
    %216 = vmatprep.subr.mxu0 0.0
    %217 = vmatpush1.msra.mxu0 0.0
    %218 = vmatprep.subr.mxu0 0.0
    %219 = vmatpush1.msra.mxu0 0.0
    %220 = vmatprep.subr.mxu0 0.0
    %221 = vmatpush1.msra.mxu0 0.0
    %222 = vmatprep.subr.mxu0 0.0
    %223 = vmatpush1.msra.mxu0 0.0
    %224 = vmatprep.subr.mxu0 0.0
    %225 = vmatpush1.msra.mxu0 0.0
    %226 = vmatprep.subr.mxu0 0.0
    %227 = vmatpush1.msra.mxu0 0.0
    %228 = vmatprep.subr.mxu0 0.0
    %229 = vmatpush1.msra.mxu0 0.0
    %230 = vmatprep.subr.mxu0 0.0
    %231 = vmatpush1.msra.mxu0 0.0
    %232 = vmatprep.subr.mxu0 0.0
    %233 = vmatpush1.msra.mxu0 0.0
    %234 = vmatprep.subr.mxu0 0.0
    %235 = vmatpush1.msra.mxu0 0.0
    %236 = vmatprep.subr.mxu0 0.0
    %237 = vmatpush1.msra.mxu0 0.0
    %238 = vmatprep.mubr.f32.mxu0 0.0
    %239 = vmatmul.mubr.f32.gmra.mrb[0].mxu0 %v101
    %v240 = vpop.f32.mrb[0].mxu0
    %v241 = vadd.f32 %v90, %v240
    %v242 = vpop.f32.mrb[0].mxu0
    %v243 = vadd.f32 %v94, %v242
    %244 = vdwg.mxu0
    %v245 = vld [vmem:[#allocation7] sm:$0xff]
    %v246 = vld [vmem:[#allocation7 + $0x8] sm:$0xff]
    %v247 = vld [vmem:[#allocation7 + $0x10] sm:$0xff]
    %v248 = vld [vmem:[#allocation7 + $0x18] sm:$0xff]
    %v249 = vld [vmem:[#allocation7 + $0x20] sm:$0xff]
    %v250 = vld [vmem:[#allocation7 + $0x28] sm:$0xff]
    %v251 = vld [vmem:[#allocation7 + $0x30] sm:$0xff]
    %v252 = vld [vmem:[#allocation7 + $0x38] sm:$0xff]
    %v253 = vld [vmem:[#allocation7 + $0x40] sm:$0xff]
    %v254 = vld [vmem:[#allocation7 + $0x48] sm:$0xff]
    %v255 = vld [vmem:[#allocation7 + $0x50] sm:$0xff]
    %v256 = vld [vmem:[#allocation7 + $0x58] sm:$0xff]
    %v257 = vld [vmem:[#allocation7 + $0x60] sm:$0xff]
    %v258 = vld [vmem:[#allocation7 + $0x68] sm:$0xff]
    %v259 = vld [vmem:[#allocation7 + $0x70] sm:$0xff]
    %v260 = vld [vmem:[#allocation7 + $0x78] sm:$0xff]
    %v261 = vld [vmem:[#allocation7 + $0x80] sm:$0xff]
    %v262 = vld [vmem:[#allocation7 + $0x88] sm:$0xff]
    %v263 = vld [vmem:[#allocation7 + $0x90] sm:$0xff]
    %v264 = vld [vmem:[#allocation7 + $0x98] sm:$0xff]
    %v265 = vld [vmem:[#allocation7 + $0xa0] sm:$0xff]
    %v266 = vld [vmem:[#allocation7 + $0xa8] sm:$0xff]
    %v267 = vld [vmem:[#allocation7 + $0xb0] sm:$0xff]
    %v268 = vld [vmem:[#allocation7 + $0xb8] sm:$0xff]
    %v269 = vld [vmem:[#allocation7 + $0xc0] sm:$0xff]
    %v270 = vld [vmem:[#allocation7 + $0xc8] sm:$0xff]
    %v271 = vld [vmem:[#allocation7 + $0xd0] sm:$0xff]
    %v272 = vld [vmem:[#allocation7 + $0xd8] sm:$0xff]
    %v273 = vld [vmem:[#allocation7 + $0xe0] sm:$0xff]
    %v274 = vld [vmem:[#allocation7 + $0xe8] sm:$0xff]
    %v275 = vld [vmem:[#allocation7 + $0xf0] sm:$0xff]
    %v276 = vld [vmem:[#allocation7 + $0xf8] sm:$0xff]
    %v277 = vld [vmem:[#allocation7 + $0x100] sm:$0xff]
    %v278 = vld [vmem:[#allocation7 + $0x108] sm:$0xff]
    %v279 = vld [vmem:[#allocation7 + $0x110] sm:$0xff]
    %v280 = vld [vmem:[#allocation7 + $0x118] sm:$0xff]
    %v281 = vld [vmem:[#allocation7 + $0x120] sm:$0xff]
    %v282 = vld [vmem:[#allocation7 + $0x128] sm:$0xff]
    %v283 = vld [vmem:[#allocation7 + $0x130] sm:$0xff]
    %v284 = vld [vmem:[#allocation7 + $0x138] sm:$0xff]
    %v285 = vld [vmem:[#allocation7 + $0x140] sm:$0xff]
    %v286 = vld [vmem:[#allocation7 + $0x148] sm:$0xff]
    %v287 = vld [vmem:[#allocation7 + $0x150] sm:$0xff]
    %v288 = vld [vmem:[#allocation7 + $0x158] sm:$0xff]
    %v289 = vld [vmem:[#allocation7 + $0x160] sm:$0xff]
    %v290 = vld [vmem:[#allocation7 + $0x168] sm:$0xff]
    %v291 = vld [vmem:[#allocation7 + $0x170] sm:$0xff]
    %v292 = vld [vmem:[#allocation7 + $0x178] sm:$0xff]
    %v293 = vld [vmem:[#allocation7 + $0x180] sm:$0xff]
    %v294 = vld [vmem:[#allocation7 + $0x188] sm:$0xff]
    %v295 = vld [vmem:[#allocation7 + $0x190] sm:$0xff]
    %v296 = vld [vmem:[#allocation7 + $0x198] sm:$0xff]
    %v297 = vld [vmem:[#allocation7 + $0x1a0] sm:$0xff]
    %v298 = vld [vmem:[#allocation7 + $0x1a8] sm:$0xff]
    %v299 = vld [vmem:[#allocation7 + $0x1b0] sm:$0xff]
    %v300 = vld [vmem:[#allocation7 + $0x1b8] sm:$0xff]
    %v301 = vld [vmem:[#allocation7 + $0x1c0] sm:$0xff]
    %v302 = vld [vmem:[#allocation7 + $0x1c8] sm:$0xff]
    %v303 = vld [vmem:[#allocation7 + $0x1d0] sm:$0xff]
    %v304 = vld [vmem:[#allocation7 + $0x1d8] sm:$0xff]
    %v305 = vld [vmem:[#allocation7 + $0x1e0] sm:$0xff]
    %v306 = vld [vmem:[#allocation7 + $0x1e8] sm:$0xff]
    %v307 = vld [vmem:[#allocation7 + $0x1f0] sm:$0xff]
    %v308 = vld [vmem:[#allocation7 + $0x1f8] sm:$0xff]
    %309 = vmatprep.subr.mxu0 %v246
    %310 = vmatpush1.msra.mxu0 %v245
    %311 = vmatprep.subr.mxu0 %v250
    %312 = vmatpush1.msra.mxu0 %v249
    %313 = vmatprep.subr.mxu0 %v254
    %314 = vmatpush1.msra.mxu0 %v253
    %315 = vmatprep.subr.mxu0 %v258
    %316 = vmatpush1.msra.mxu0 %v257
    %317 = vmatprep.subr.mxu0 %v262
    %318 = vmatpush1.msra.mxu0 %v261
    %319 = vmatprep.subr.mxu0 %v266
    %320 = vmatpush1.msra.mxu0 %v265
    %321 = vmatprep.subr.mxu0 %v270
    %322 = vmatpush1.msra.mxu0 %v269
    %323 = vmatprep.subr.mxu0 %v274
    %324 = vmatpush1.msra.mxu0 %v273
    %325 = vmatprep.subr.mxu0 %v278
    %326 = vmatpush1.msra.mxu0 %v277
    %327 = vmatprep.subr.mxu0 %v282
    %328 = vmatpush1.msra.mxu0 %v281
    %329 = vmatprep.subr.mxu0 %v286
    %330 = vmatpush1.msra.mxu0 %v285
    %331 = vmatprep.subr.mxu0 %v290
    %332 = vmatpush1.msra.mxu0 %v289
    %333 = vmatprep.subr.mxu0 %v294
    %334 = vmatpush1.msra.mxu0 %v293
    %335 = vmatprep.subr.mxu0 %v298
    %336 = vmatpush1.msra.mxu0 %v297
    %337 = vmatprep.subr.mxu0 %v302
    %338 = vmatpush1.msra.mxu0 %v301
    %339 = vmatprep.subr.mxu0 %v306
    %340 = vmatpush1.msra.mxu0 %v305
    %341 = vmatprep.subr.mxu0 0.0
    %342 = vmatpush1.msra.mxu0 0.0
    %343 = vmatprep.subr.mxu0 0.0
    %344 = vmatpush1.msra.mxu0 0.0
    %345 = vmatprep.subr.mxu0 0.0
    %346 = vmatpush1.msra.mxu0 0.0
    %347 = vmatprep.subr.mxu0 0.0
    %348 = vmatpush1.msra.mxu0 0.0
    %349 = vmatprep.subr.mxu0 0.0
    %350 = vmatpush1.msra.mxu0 0.0
    %351 = vmatprep.subr.mxu0 0.0
    %352 = vmatpush1.msra.mxu0 0.0
    %353 = vmatprep.subr.mxu0 0.0
    %354 = vmatpush1.msra.mxu0 0.0
    %355 = vmatprep.subr.mxu0 0.0
    %356 = vmatpush1.msra.mxu0 0.0
    %357 = vmatprep.subr.mxu0 0.0
    %358 = vmatpush1.msra.mxu0 0.0
    %359 = vmatprep.subr.mxu0 0.0
    %360 = vmatpush1.msra.mxu0 0.0
    %361 = vmatprep.subr.mxu0 0.0
    %362 = vmatpush1.msra.mxu0 0.0
    %363 = vmatprep.subr.mxu0 0.0
    %364 = vmatpush1.msra.mxu0 0.0
    %365 = vmatprep.subr.mxu0 0.0
    %366 = vmatpush1.msra.mxu0 0.0
    %367 = vmatprep.subr.mxu0 0.0
    %368 = vmatpush1.msra.mxu0 0.0
    %369 = vmatprep.subr.mxu0 0.0
    %370 = vmatpush1.msra.mxu0 0.0
    %371 = vmatprep.subr.mxu0 0.0
    %372 = vmatpush1.msra.mxu0 0.0
    %373 = vmatprep.mubr.f32.mxu0 0.0
    %374 = vmatmul.mubr.f32.gmra.mrb[0].mxu0 0.0
    %v375 = vpop.f32.mrb[0].mxu0
    %v376 = vadd.f32 0.0, %v375
    %v377 = vpop.f32.mrb[0].mxu0
    %v378 = vadd.f32 0.0, %v377
    %379 = vdwg.mxu0
    %380 = vmatprep.subr.mxu0 %v248
    %381 = vmatpush1.msra.mxu0 %v247
    %382 = vmatprep.subr.mxu0 %v252
    %383 = vmatpush1.msra.mxu0 %v251
    %384 = vmatprep.subr.mxu0 %v256
    %385 = vmatpush1.msra.mxu0 %v255
    %386 = vmatprep.subr.mxu0 %v260
    %387 = vmatpush1.msra.mxu0 %v259
    %388 = vmatprep.subr.mxu0 %v264
    %389 = vmatpush1.msra.mxu0 %v263
    %390 = vmatprep.subr.mxu0 %v268
    %391 = vmatpush1.msra.mxu0 %v267
    %392 = vmatprep.subr.mxu0 %v272
    %393 = vmatpush1.msra.mxu0 %v271
    %394 = vmatprep.subr.mxu0 %v276
    %395 = vmatpush1.msra.mxu0 %v275
    %396 = vmatprep.subr.mxu0 %v280
    %397 = vmatpush1.msra.mxu0 %v279
    %398 = vmatprep.subr.mxu0 %v284
    %399 = vmatpush1.msra.mxu0 %v283
    %400 = vmatprep.subr.mxu0 %v288
    %401 = vmatpush1.msra.mxu0 %v287
    %402 = vmatprep.subr.mxu0 %v292
    %403 = vmatpush1.msra.mxu0 %v291
    %404 = vmatprep.subr.mxu0 %v296
    %405 = vmatpush1.msra.mxu0 %v295
    %406 = vmatprep.subr.mxu0 %v300
    %407 = vmatpush1.msra.mxu0 %v299
    %408 = vmatprep.subr.mxu0 %v304
    %409 = vmatpush1.msra.mxu0 %v303
    %410 = vmatprep.subr.mxu0 %v308
    %411 = vmatpush1.msra.mxu0 %v307
    %412 = vmatprep.subr.mxu0 0.0
    %413 = vmatpush1.msra.mxu0 0.0
    %414 = vmatprep.subr.mxu0 0.0
    %415 = vmatpush1.msra.mxu0 0.0
    %416 = vmatprep.subr.mxu0 0.0
    %417 = vmatpush1.msra.mxu0 0.0
    %418 = vmatprep.subr.mxu0 0.0
    %419 = vmatpush1.msra.mxu0 0.0
    %420 = vmatprep.subr.mxu0 0.0
    %421 = vmatpush1.msra.mxu0 0.0
    %422 = vmatprep.subr.mxu0 0.0
    %423 = vmatpush1.msra.mxu0 0.0
    %424 = vmatprep.subr.mxu0 0.0
    %425 = vmatpush1.msra.mxu0 0.0
    %426 = vmatprep.subr.mxu0 0.0
    %427 = vmatpush1.msra.mxu0 0.0
    %428 = vmatprep.subr.mxu0 0.0
    %429 = vmatpush1.msra.mxu0 0.0
    %430 = vmatprep.subr.mxu0 0.0
    %431 = vmatpush1.msra.mxu0 0.0
    %432 = vmatprep.subr.mxu0 0.0
    %433 = vmatpush1.msra.mxu0 0.0
    %434 = vmatprep.subr.mxu0 0.0
    %435 = vmatpush1.msra.mxu0 0.0
    %436 = vmatprep.subr.mxu0 0.0
    %437 = vmatpush1.msra.mxu0 0.0
    %438 = vmatprep.subr.mxu0 0.0
    %439 = vmatpush1.msra.mxu0 0.0
    %440 = vmatprep.subr.mxu0 0.0
    %441 = vmatpush1.msra.mxu0 0.0
    %442 = vmatprep.subr.mxu0 0.0
    %443 = vmatpush1.msra.mxu0 0.0
    %444 = vmatprep.mubr.f32.mxu0 0.0
    %445 = vmatmul.mubr.f32.gmra.mrb[0].mxu0 0.0
    %v446 = vpop.f32.mrb[0].mxu0
    %v447 = vadd.f32 0.0, %v446
    %v448 = vpop.f32.mrb[0].mxu0
    %v449 = vadd.f32 0.0, %v448
    %450 = vdwg.mxu0
    %v451 = vadd.f32 %v170, %v376
    %v452 = vadd.f32 %v172, %v378
    %v453 = vadd.f32 %v241, %v447
    %v454 = vadd.f32 %v243, %v449
    %v455 = vxor.u32 %v451, 2147483648
    %v456 = vxor.u32 %v452, 2147483648
    %v457 = vxor.u32 %v454, 2147483648
    %v458 = vmul.f32 %v455, 1.442695
    %v459 = vpow.pop %v458
    %v460 = vmul.f32 %v456, 1.442695
    %v461 = vpow.pop %v460
    %v462 = vmul.f32 %v457, 1.442695
    %v463 = vpow.pop %v462
    %v464 = vadd.f32 %v459, 1.0
    %v465 = vadd.f32 %v461, 1.0
    %v466 = vadd.f32 %v463, 1.0
    %v467 = vrcp.pop %v464
    %v468 = vmul.f32 1.0, %v467
    %v469 = vrcp.pop %v465
    %v470 = vmul.f32 1.0, %v469
    %v471 = vrcp.pop %v466
    %v472 = vmul.f32 1.0, %v471
    %v473 = vtanh.pop %v453
    %v474 = vmul.f32 %v470, 0.0
    %v475 = vmul.f32 %v468, %v473
    %v476 = vadd.f32 %v474, %v475
    %v477 = vtanh.pop %v476
    %v478 = vmul.f32 %v472, %v477
    %479 = vmatprep.subr.mxu0 %v246
    %480 = vmatpush1.msra.mxu0 %v245
    %481 = vmatprep.subr.mxu0 %v250
    %482 = vmatpush1.msra.mxu0 %v249
    %483 = vmatprep.subr.mxu0 %v254
    %484 = vmatpush1.msra.mxu0 %v253
    %485 = vmatprep.subr.mxu0 %v258
    %486 = vmatpush1.msra.mxu0 %v257
    %487 = vmatprep.subr.mxu0 %v262
    %488 = vmatpush1.msra.mxu0 %v261
    %489 = vmatprep.subr.mxu0 %v266
    %490 = vmatpush1.msra.mxu0 %v265
    %491 = vmatprep.subr.mxu0 %v270
    %492 = vmatpush1.msra.mxu0 %v269
    %493 = vmatprep.subr.mxu0 %v274
    %494 = vmatpush1.msra.mxu0 %v273
    %495 = vmatprep.subr.mxu0 %v278
    %496 = vmatpush1.msra.mxu0 %v277
    %497 = vmatprep.subr.mxu0 %v282
    %498 = vmatpush1.msra.mxu0 %v281
    %499 = vmatprep.subr.mxu0 %v286
    %500 = vmatpush1.msra.mxu0 %v285
    %501 = vmatprep.subr.mxu0 %v290
    %502 = vmatpush1.msra.mxu0 %v289
    %503 = vmatprep.subr.mxu0 %v294
    %504 = vmatpush1.msra.mxu0 %v293
    %505 = vmatprep.subr.mxu0 %v298
    %506 = vmatpush1.msra.mxu0 %v297
    %507 = vmatprep.subr.mxu0 %v302
    %508 = vmatpush1.msra.mxu0 %v301
    %509 = vmatprep.subr.mxu0 %v306
    %510 = vmatpush1.msra.mxu0 %v305
    %511 = vmatprep.subr.mxu0 0.0
    %512 = vmatpush1.msra.mxu0 0.0
    %513 = vmatprep.subr.mxu0 0.0
    %514 = vmatpush1.msra.mxu0 0.0
    %515 = vmatprep.subr.mxu0 0.0
    %516 = vmatpush1.msra.mxu0 0.0
    %517 = vmatprep.subr.mxu0 0.0
    %518 = vmatpush1.msra.mxu0 0.0
    %519 = vmatprep.subr.mxu0 0.0
    %520 = vmatpush1.msra.mxu0 0.0
    %521 = vmatprep.subr.mxu0 0.0
    %522 = vmatpush1.msra.mxu0 0.0
    %523 = vmatprep.subr.mxu0 0.0
    %524 = vmatpush1.msra.mxu0 0.0
    %525 = vmatprep.subr.mxu0 0.0
    %526 = vmatpush1.msra.mxu0 0.0
    %527 = vmatprep.subr.mxu0 0.0
    %528 = vmatpush1.msra.mxu0 0.0
    %529 = vmatprep.subr.mxu0 0.0
    %530 = vmatpush1.msra.mxu0 0.0
    %531 = vmatprep.subr.mxu0 0.0
    %532 = vmatpush1.msra.mxu0 0.0
    %533 = vmatprep.subr.mxu0 0.0
    %534 = vmatpush1.msra.mxu0 0.0
    %535 = vmatprep.subr.mxu0 0.0
    %536 = vmatpush1.msra.mxu0 0.0
    %537 = vmatprep.subr.mxu0 0.0
    %538 = vmatpush1.msra.mxu0 0.0
    %539 = vmatprep.subr.mxu0 0.0
    %540 = vmatpush1.msra.mxu0 0.0
    %541 = vmatprep.subr.mxu0 0.0
    %542 = vmatpush1.msra.mxu0 0.0
    %543 = vmatprep.mubr.f32.mxu0 0.0
    %544 = vmatmul.mubr.f32.gmra.mrb[0].mxu0 %v478
    %v545 = vpop.f32.mrb[0].mxu0
    %v546 = vadd.f32 0.0, %v545
    %v547 = vpop.f32.mrb[0].mxu0
    %v548 = vadd.f32 0.0, %v547
    %549 = vdwg.mxu0
    %550 = vmatprep.subr.mxu0 %v248
    %551 = vmatpush1.msra.mxu0 %v247
    %552 = vmatprep.subr.mxu0 %v252
    %553 = vmatpush1.msra.mxu0 %v251
    %554 = vmatprep.subr.mxu0 %v256
    %555 = vmatpush1.msra.mxu0 %v255
    %556 = vmatprep.subr.mxu0 %v260
    %557 = vmatpush1.msra.mxu0 %v259
    %558 = vmatprep.subr.mxu0 %v264
    %559 = vmatpush1.msra.mxu0 %v263
    %560 = vmatprep.subr.mxu0 %v268
    %561 = vmatpush1.msra.mxu0 %v267
    %562 = vmatprep.subr.mxu0 %v272
    %563 = vmatpush1.msra.mxu0 %v271
    %564 = vmatprep.subr.mxu0 %v276
    %565 = vmatpush1.msra.mxu0 %v275
    %566 = vmatprep.subr.mxu0 %v280
    %567 = vmatpush1.msra.mxu0 %v279
    %568 = vmatprep.subr.mxu0 %v284
    %569 = vmatpush1.msra.mxu0 %v283
    %570 = vmatprep.subr.mxu0 %v288
    %571 = vmatpush1.msra.mxu0 %v287
    %572 = vmatprep.subr.mxu0 %v292
    %573 = vmatpush1.msra.mxu0 %v291
    %574 = vmatprep.subr.mxu0 %v296
    %575 = vmatpush1.msra.mxu0 %v295
    %576 = vmatprep.subr.mxu0 %v300
    %577 = vmatpush1.msra.mxu0 %v299
    %578 = vmatprep.subr.mxu0 %v304
    %579 = vmatpush1.msra.mxu0 %v303
    %580 = vmatprep.subr.mxu0 %v308
    %581 = vmatpush1.msra.mxu0 %v307
    %582 = vmatprep.subr.mxu0 0.0
    %583 = vmatpush1.msra.mxu0 0.0
    %584 = vmatprep.subr.mxu0 0.0
    %585 = vmatpush1.msra.mxu0 0.0
    %586 = vmatprep.subr.mxu0 0.0
    %587 = vmatpush1.msra.mxu0 0.0
    %588 = vmatprep.subr.mxu0 0.0
    %589 = vmatpush1.msra.mxu0 0.0
    %590 = vmatprep.subr.mxu0 0.0
    %591 = vmatpush1.msra.mxu0 0.0
    %592 = vmatprep.subr.mxu0 0.0
    %593 = vmatpush1.msra.mxu0 0.0
    %594 = vmatprep.subr.mxu0 0.0
    %595 = vmatpush1.msra.mxu0 0.0
    %596 = vmatprep.subr.mxu0 0.0
    %597 = vmatpush1.msra.mxu0 0.0
    %598 = vmatprep.subr.mxu0 0.0
    %599 = vmatpush1.msra.mxu0 0.0
    %600 = vmatprep.subr.mxu0 0.0
    %601 = vmatpush1.msra.mxu0 0.0
    %602 = vmatprep.subr.mxu0 0.0
    %603 = vmatpush1.msra.mxu0 0.0
    %604 = vmatprep.subr.mxu0 0.0
    %605 = vmatpush1.msra.mxu0 0.0
    %606 = vmatprep.subr.mxu0 0.0
    %607 = vmatpush1.msra.mxu0 0.0
    %608 = vmatprep.subr.mxu0 0.0
    %609 = vmatpush1.msra.mxu0 0.0
    %610 = vmatprep.subr.mxu0 0.0
    %611 = vmatpush1.msra.mxu0 0.0
    %612 = vmatprep.subr.mxu0 0.0
    %613 = vmatpush1.msra.mxu0 0.0
    %614 = vmatprep.mubr.f32.mxu0 0.0
    %615 = vmatmul.mubr.f32.gmra.mrb[0].mxu0 %v478
    %v616 = vpop.f32.mrb[0].mxu0
    %v617 = vadd.f32 0.0, %v616
    %v618 = vpop.f32.mrb[0].mxu0
    %v619 = vadd.f32 0.0, %v618
    %620 = vdwg.mxu0
    %v625 = vrot.slane %v546, 7
    %v626 = vrot.slane %v548, 7
    %v627 = vrot.slane %v617, 7
    %v628 = vrot.slane %v619, 7
    %v633 = vadd.f32 %v170, %v625
    %v634 = vadd.f32 %v172, %v626
    %v635 = vadd.f32 %v241, %v627
    %v636 = vadd.f32 %v243, %v628
    %v637 = vxor.u32 %v633, 2147483648
    %v638 = vxor.u32 %v634, 2147483648
    %v639 = vxor.u32 %v636, 2147483648
    %v640 = vmul.f32 %v637, 1.442695
    %v641 = vpow.pop %v640
    %v642 = vmul.f32 %v638, 1.442695
    %v643 = vpow.pop %v642
    %v644 = vmul.f32 %v639, 1.442695
    %v645 = vpow.pop %v644
    %v646 = vadd.f32 %v641, 1.0
    %v647 = vadd.f32 %v643, 1.0
    %v648 = vadd.f32 %v645, 1.0
    %v649 = vrcp.pop %v646
    %v650 = vmul.f32 1.0, %v649
    %v651 = vrcp.pop %v647
    %v652 = vmul.f32 1.0, %v651
    %v653 = vrcp.pop %v648
    %v654 = vmul.f32 1.0, %v653
    %v655 = vtanh.pop %v635
    %v657 = vrot.slane %v476, 7
    %v659 = vmul.f32 %v652, %v657
    %v660 = vmul.f32 %v650, %v655
    %v661 = vadd.f32 %v659, %v660
    %v662 = vtanh.pop %v661
    %v663 = vmul.f32 %v654, %v662
    %v665 = vrot.slane %v663, 1
    %667 = vmatprep.subr.mxu0 %v246
    %668 = vmatpush1.msra.mxu0 %v245
    %669 = vmatprep.subr.mxu0 %v250
    %670 = vmatpush1.msra.mxu0 %v249
    %671 = vmatprep.subr.mxu0 %v254
    %672 = vmatpush1.msra.mxu0 %v253
    %673 = vmatprep.subr.mxu0 %v258
    %674 = vmatpush1.msra.mxu0 %v257
    %675 = vmatprep.subr.mxu0 %v262
    %676 = vmatpush1.msra.mxu0 %v261
    %677 = vmatprep.subr.mxu0 %v266
    %678 = vmatpush1.msra.mxu0 %v265
    %679 = vmatprep.subr.mxu0 %v270
    %680 = vmatpush1.msra.mxu0 %v269
    %681 = vmatprep.subr.mxu0 %v274
    %682 = vmatpush1.msra.mxu0 %v273
    %683 = vmatprep.subr.mxu0 %v278
    %684 = vmatpush1.msra.mxu0 %v277
    %685 = vmatprep.subr.mxu0 %v282
    %686 = vmatpush1.msra.mxu0 %v281
    %687 = vmatprep.subr.mxu0 %v286
    %688 = vmatpush1.msra.mxu0 %v285
    %689 = vmatprep.subr.mxu0 %v290
    %690 = vmatpush1.msra.mxu0 %v289
    %691 = vmatprep.subr.mxu0 %v294
    %692 = vmatpush1.msra.mxu0 %v293
    %693 = vmatprep.subr.mxu0 %v298
    %694 = vmatpush1.msra.mxu0 %v297
    %695 = vmatprep.subr.mxu0 %v302
    %696 = vmatpush1.msra.mxu0 %v301
    %697 = vmatprep.subr.mxu0 %v306
    %698 = vmatpush1.msra.mxu0 %v305
    %699 = vmatprep.subr.mxu0 0.0
    %700 = vmatpush1.msra.mxu0 0.0
    %701 = vmatprep.subr.mxu0 0.0
    %702 = vmatpush1.msra.mxu0 0.0
    %703 = vmatprep.subr.mxu0 0.0
    %704 = vmatpush1.msra.mxu0 0.0
    %705 = vmatprep.subr.mxu0 0.0
    %706 = vmatpush1.msra.mxu0 0.0
    %707 = vmatprep.subr.mxu0 0.0
    %708 = vmatpush1.msra.mxu0 0.0
    %709 = vmatprep.subr.mxu0 0.0
    %710 = vmatpush1.msra.mxu0 0.0
    %711 = vmatprep.subr.mxu0 0.0
    %712 = vmatpush1.msra.mxu0 0.0
    %713 = vmatprep.subr.mxu0 0.0
    %714 = vmatpush1.msra.mxu0 0.0
    %715 = vmatprep.subr.mxu0 0.0
    %716 = vmatpush1.msra.mxu0 0.0
    %717 = vmatprep.subr.mxu0 0.0
    %718 = vmatpush1.msra.mxu0 0.0
    %719 = vmatprep.subr.mxu0 0.0
    %720 = vmatpush1.msra.mxu0 0.0
    %721 = vmatprep.subr.mxu0 0.0
    %722 = vmatpush1.msra.mxu0 0.0
    %723 = vmatprep.subr.mxu0 0.0
    %724 = vmatpush1.msra.mxu0 0.0
    %725 = vmatprep.subr.mxu0 0.0
    %726 = vmatpush1.msra.mxu0 0.0
    %727 = vmatprep.subr.mxu0 0.0
    %728 = vmatpush1.msra.mxu0 0.0
    %729 = vmatprep.subr.mxu0 0.0
    %730 = vmatpush1.msra.mxu0 0.0
    %731 = vmatprep.mubr.f32.mxu0 0.0
    %732 = vmatmul.mubr.f32.gmra.mrb[0].mxu0 %v665
    %v733 = vpop.f32.mrb[0].mxu0
    %v734 = vadd.f32 0.0, %v733
    %v735 = vpop.f32.mrb[0].mxu0
    %v736 = vadd.f32 0.0, %v735
    %737 = vdwg.mxu0
    %738 = vmatprep.subr.mxu0 %v248
    %739 = vmatpush1.msra.mxu0 %v247
    %740 = vmatprep.subr.mxu0 %v252
    %741 = vmatpush1.msra.mxu0 %v251
    %742 = vmatprep.subr.mxu0 %v256
    %743 = vmatpush1.msra.mxu0 %v255
    %744 = vmatprep.subr.mxu0 %v260
    %745 = vmatpush1.msra.mxu0 %v259
    %746 = vmatprep.subr.mxu0 %v264
    %747 = vmatpush1.msra.mxu0 %v263
    %748 = vmatprep.subr.mxu0 %v268
    %749 = vmatpush1.msra.mxu0 %v267
    %750 = vmatprep.subr.mxu0 %v272
    %751 = vmatpush1.msra.mxu0 %v271
    %752 = vmatprep.subr.mxu0 %v276
    %753 = vmatpush1.msra.mxu0 %v275
    %754 = vmatprep.subr.mxu0 %v280
    %755 = vmatpush1.msra.mxu0 %v279
    %756 = vmatprep.subr.mxu0 %v284
    %757 = vmatpush1.msra.mxu0 %v283
    %758 = vmatprep.subr.mxu0 %v288
    %759 = vmatpush1.msra.mxu0 %v287
    %760 = vmatprep.subr.mxu0 %v292
    %761 = vmatpush1.msra.mxu0 %v291
    %762 = vmatprep.subr.mxu0 %v296
    %763 = vmatpush1.msra.mxu0 %v295
    %764 = vmatprep.subr.mxu0 %v300
    %765 = vmatpush1.msra.mxu0 %v299
    %766 = vmatprep.subr.mxu0 %v304
    %767 = vmatpush1.msra.mxu0 %v303
    %768 = vmatprep.subr.mxu0 %v308
    %769 = vmatpush1.msra.mxu0 %v307
    %770 = vmatprep.subr.mxu0 0.0
    %771 = vmatpush1.msra.mxu0 0.0
    %772 = vmatprep.subr.mxu0 0.0
    %773 = vmatpush1.msra.mxu0 0.0
    %774 = vmatprep.subr.mxu0 0.0
    %775 = vmatpush1.msra.mxu0 0.0
    %776 = vmatprep.subr.mxu0 0.0
    %777 = vmatpush1.msra.mxu0 0.0
    %778 = vmatprep.subr.mxu0 0.0
    %779 = vmatpush1.msra.mxu0 0.0
    %780 = vmatprep.subr.mxu0 0.0
    %781 = vmatpush1.msra.mxu0 0.0
    %782 = vmatprep.subr.mxu0 0.0
    %783 = vmatpush1.msra.mxu0 0.0
    %784 = vmatprep.subr.mxu0 0.0
    %785 = vmatpush1.msra.mxu0 0.0
    %786 = vmatprep.subr.mxu0 0.0
    %787 = vmatpush1.msra.mxu0 0.0
    %788 = vmatprep.subr.mxu0 0.0
    %789 = vmatpush1.msra.mxu0 0.0
    %790 = vmatprep.subr.mxu0 0.0
    %791 = vmatpush1.msra.mxu0 0.0
    %792 = vmatprep.subr.mxu0 0.0
    %793 = vmatpush1.msra.mxu0 0.0
    %794 = vmatprep.subr.mxu0 0.0
    %795 = vmatpush1.msra.mxu0 0.0
    %796 = vmatprep.subr.mxu0 0.0
    %797 = vmatpush1.msra.mxu0 0.0
    %798 = vmatprep.subr.mxu0 0.0
    %799 = vmatpush1.msra.mxu0 0.0
    %800 = vmatprep.subr.mxu0 0.0
    %801 = vmatpush1.msra.mxu0 0.0
    %802 = vmatprep.mubr.f32.mxu0 0.0
    %803 = vmatmul.mubr.f32.gmra.mrb[0].mxu0 %v665
    %v804 = vpop.f32.mrb[0].mxu0
    %v805 = vadd.f32 0.0, %v804
    %v806 = vpop.f32.mrb[0].mxu0
    %v807 = vadd.f32 0.0, %v806
    %808 = vdwg.mxu0
    %v813 = vrot.slane %v734, 6
    %v814 = vrot.slane %v736, 6
    %v815 = vrot.slane %v805, 6
    %v816 = vrot.slane %v807, 6
    %v821 = vadd.f32 %v170, %v813
    %v822 = vadd.f32 %v172, %v814
    %v823 = vadd.f32 %v241, %v815
    %v824 = vadd.f32 %v243, %v816
    %v825 = vxor.u32 %v821, 2147483648
    %v826 = vxor.u32 %v822, 2147483648
    %v827 = vxor.u32 %v824, 2147483648
    %v828 = vmul.f32 %v825, 1.442695
    %v829 = vpow.pop %v828
    %v830 = vmul.f32 %v826, 1.442695
    %v831 = vpow.pop %v830
    %v832 = vmul.f32 %v827, 1.442695
    %v833 = vpow.pop %v832
    %v834 = vadd.f32 %v829, 1.0
    %v835 = vadd.f32 %v831, 1.0
    %v836 = vadd.f32 %v833, 1.0
    %v837 = vrcp.pop %v834
    %v838 = vmul.f32 1.0, %v837
    %v839 = vrcp.pop %v835
    %v840 = vmul.f32 1.0, %v839
    %v841 = vrcp.pop %v836
    %v842 = vmul.f32 1.0, %v841
    %v843 = vtanh.pop %v823
    %v845 = vrot.slane %v661, 7
    %v847 = vmul.f32 %v840, %v845
    %v848 = vmul.f32 %v838, %v843
    %v849 = vadd.f32 %v847, %v848
    %v850 = vtanh.pop %v849
    %v851 = vmul.f32 %v842, %v850
    %v853 = vrot.slane %v851, 2
    %855 = vmatprep.subr.mxu0 %v246
    %856 = vmatpush1.msra.mxu0 %v245
    %857 = vmatprep.subr.mxu0 %v250
    %858 = vmatpush1.msra.mxu0 %v249
    %859 = vmatprep.subr.mxu0 %v254
    %860 = vmatpush1.msra.mxu0 %v253
    %861 = vmatprep.subr.mxu0 %v258
    %862 = vmatpush1.msra.mxu0 %v257
    %863 = vmatprep.subr.mxu0 %v262
    %864 = vmatpush1.msra.mxu0 %v261
    %865 = vmatprep.subr.mxu0 %v266
    %866 = vmatpush1.msra.mxu0 %v265
    %867 = vmatprep.subr.mxu0 %v270
    %868 = vmatpush1.msra.mxu0 %v269
    %869 = vmatprep.subr.mxu0 %v274
    %870 = vmatpush1.msra.mxu0 %v273
    %871 = vmatprep.subr.mxu0 %v278
    %872 = vmatpush1.msra.mxu0 %v277
    %873 = vmatprep.subr.mxu0 %v282
    %874 = vmatpush1.msra.mxu0 %v281
    %875 = vmatprep.subr.mxu0 %v286
    %876 = vmatpush1.msra.mxu0 %v285
    %877 = vmatprep.subr.mxu0 %v290
    %878 = vmatpush1.msra.mxu0 %v289
    %879 = vmatprep.subr.mxu0 %v294
    %880 = vmatpush1.msra.mxu0 %v293
    %881 = vmatprep.subr.mxu0 %v298
    %882 = vmatpush1.msra.mxu0 %v297
    %883 = vmatprep.subr.mxu0 %v302
    %884 = vmatpush1.msra.mxu0 %v301
    %885 = vmatprep.subr.mxu0 %v306
    %886 = vmatpush1.msra.mxu0 %v305
    %887 = vmatprep.subr.mxu0 0.0
    %888 = vmatpush1.msra.mxu0 0.0
    %889 = vmatprep.subr.mxu0 0.0
    %890 = vmatpush1.msra.mxu0 0.0
    %891 = vmatprep.subr.mxu0 0.0
    %892 = vmatpush1.msra.mxu0 0.0
    %893 = vmatprep.subr.mxu0 0.0
    %894 = vmatpush1.msra.mxu0 0.0
    %895 = vmatprep.subr.mxu0 0.0
    %896 = vmatpush1.msra.mxu0 0.0
    %897 = vmatprep.subr.mxu0 0.0
    %898 = vmatpush1.msra.mxu0 0.0
    %899 = vmatprep.subr.mxu0 0.0
    %900 = vmatpush1.msra.mxu0 0.0
    %901 = vmatprep.subr.mxu0 0.0
    %902 = vmatpush1.msra.mxu0 0.0
    %903 = vmatprep.subr.mxu0 0.0
    %904 = vmatpush1.msra.mxu0 0.0
    %905 = vmatprep.subr.mxu0 0.0
    %906 = vmatpush1.msra.mxu0 0.0
    %907 = vmatprep.subr.mxu0 0.0
    %908 = vmatpush1.msra.mxu0 0.0
    %909 = vmatprep.subr.mxu0 0.0
    %910 = vmatpush1.msra.mxu0 0.0
    %911 = vmatprep.subr.mxu0 0.0
    %912 = vmatpush1.msra.mxu0 0.0
    %913 = vmatprep.subr.mxu0 0.0
    %914 = vmatpush1.msra.mxu0 0.0
    %915 = vmatprep.subr.mxu0 0.0
    %916 = vmatpush1.msra.mxu0 0.0
    %917 = vmatprep.subr.mxu0 0.0
    %918 = vmatpush1.msra.mxu0 0.0
    %919 = vmatprep.mubr.f32.mxu0 0.0
    %920 = vmatmul.mubr.f32.gmra.mrb[0].mxu0 %v853
    %v921 = vpop.f32.mrb[0].mxu0
    %v922 = vadd.f32 0.0, %v921
    %v923 = vpop.f32.mrb[0].mxu0
    %v924 = vadd.f32 0.0, %v923
    %925 = vdwg.mxu0
    %926 = vmatprep.subr.mxu0 %v248
    %927 = vmatpush1.msra.mxu0 %v247
    %928 = vmatprep.subr.mxu0 %v252
    %929 = vmatpush1.msra.mxu0 %v251
    %930 = vmatprep.subr.mxu0 %v256
    %931 = vmatpush1.msra.mxu0 %v255
    %932 = vmatprep.subr.mxu0 %v260
    %933 = vmatpush1.msra.mxu0 %v259
    %934 = vmatprep.subr.mxu0 %v264
    %935 = vmatpush1.msra.mxu0 %v263
    %936 = vmatprep.subr.mxu0 %v268
    %937 = vmatpush1.msra.mxu0 %v267
    %938 = vmatprep.subr.mxu0 %v272
    %939 = vmatpush1.msra.mxu0 %v271
    %940 = vmatprep.subr.mxu0 %v276
    %941 = vmatpush1.msra.mxu0 %v275
    %942 = vmatprep.subr.mxu0 %v280
    %943 = vmatpush1.msra.mxu0 %v279
    %944 = vmatprep.subr.mxu0 %v284
    %945 = vmatpush1.msra.mxu0 %v283
    %946 = vmatprep.subr.mxu0 %v288
    %947 = vmatpush1.msra.mxu0 %v287
    %948 = vmatprep.subr.mxu0 %v292
    %949 = vmatpush1.msra.mxu0 %v291
    %950 = vmatprep.subr.mxu0 %v296
    %951 = vmatpush1.msra.mxu0 %v295
    %952 = vmatprep.subr.mxu0 %v300
    %953 = vmatpush1.msra.mxu0 %v299
    %954 = vmatprep.subr.mxu0 %v304
    %955 = vmatpush1.msra.mxu0 %v303
    %956 = vmatprep.subr.mxu0 %v308
    %957 = vmatpush1.msra.mxu0 %v307
    %958 = vmatprep.subr.mxu0 0.0
    %959 = vmatpush1.msra.mxu0 0.0
    %960 = vmatprep.subr.mxu0 0.0
    %961 = vmatpush1.msra.mxu0 0.0
    %962 = vmatprep.subr.mxu0 0.0
    %963 = vmatpush1.msra.mxu0 0.0
    %964 = vmatprep.subr.mxu0 0.0
    %965 = vmatpush1.msra.mxu0 0.0
    %966 = vmatprep.subr.mxu0 0.0
    %967 = vmatpush1.msra.mxu0 0.0
    %968 = vmatprep.subr.mxu0 0.0
    %969 = vmatpush1.msra.mxu0 0.0
    %970 = vmatprep.subr.mxu0 0.0
    %971 = vmatpush1.msra.mxu0 0.0
    %972 = vmatprep.subr.mxu0 0.0
    %973 = vmatpush1.msra.mxu0 0.0
    %974 = vmatprep.subr.mxu0 0.0
    %975 = vmatpush1.msra.mxu0 0.0
    %976 = vmatprep.subr.mxu0 0.0
    %977 = vmatpush1.msra.mxu0 0.0
    %978 = vmatprep.subr.mxu0 0.0
    %979 = vmatpush1.msra.mxu0 0.0
    %980 = vmatprep.subr.mxu0 0.0
    %981 = vmatpush1.msra.mxu0 0.0
    %982 = vmatprep.subr.mxu0 0.0
    %983 = vmatpush1.msra.mxu0 0.0
    %984 = vmatprep.subr.mxu0 0.0
    %985 = vmatpush1.msra.mxu0 0.0
    %986 = vmatprep.subr.mxu0 0.0
    %987 = vmatpush1.msra.mxu0 0.0
    %988 = vmatprep.subr.mxu0 0.0
    %989 = vmatpush1.msra.mxu0 0.0
    %990 = vmatprep.mubr.f32.mxu0 0.0
    %991 = vmatmul.mubr.f32.gmra.mrb[0].mxu0 %v853
    %v992 = vpop.f32.mrb[0].mxu0
    %v993 = vadd.f32 0.0, %v992
    %v994 = vpop.f32.mrb[0].mxu0
    %v995 = vadd.f32 0.0, %v994
    %996 = vdwg.mxu0
    %v1001 = vrot.slane %v922, 5
    %v1002 = vrot.slane %v924, 5
    %v1003 = vrot.slane %v993, 5
    %v1004 = vrot.slane %v995, 5
    %v1009 = vadd.f32 %v170, %v1001
    %v1010 = vadd.f32 %v172, %v1002
    %v1011 = vadd.f32 %v241, %v1003
    %v1012 = vadd.f32 %v243, %v1004
    %v1013 = vxor.u32 %v1009, 2147483648
    %v1014 = vxor.u32 %v1010, 2147483648
    %v1015 = vxor.u32 %v1012, 2147483648
    %v1016 = vmul.f32 %v1013, 1.442695
    %v1017 = vpow.pop %v1016
    %v1018 = vmul.f32 %v1014, 1.442695
    %v1019 = vpow.pop %v1018
    %v1020 = vmul.f32 %v1015, 1.442695
    %v1021 = vpow.pop %v1020
    %v1022 = vadd.f32 %v1017, 1.0
    %v1023 = vadd.f32 %v1019, 1.0
    %v1024 = vadd.f32 %v1021, 1.0
    %v1025 = vrcp.pop %v1022
    %v1026 = vmul.f32 1.0, %v1025
    %v1027 = vrcp.pop %v1023
    %v1028 = vmul.f32 1.0, %v1027
    %v1029 = vrcp.pop %v1024
    %v1030 = vmul.f32 1.0, %v1029
    %v1031 = vtanh.pop %v1011
    %v1033 = vrot.slane %v849, 7
    %v1035 = vmul.f32 %v1028, %v1033
    %v1036 = vmul.f32 %v1026, %v1031
    %v1037 = vadd.f32 %v1035, %v1036
    %v1038 = vtanh.pop %v1037
    %v1039 = vmul.f32 %v1030, %v1038
    %v1041 = vrot.slane %v1039, 3
    %1043 = vmatprep.subr.mxu0 %v246
    %1044 = vmatpush1.msra.mxu0 %v245
    %1045 = vmatprep.subr.mxu0 %v250
    %1046 = vmatpush1.msra.mxu0 %v249
    %1047 = vmatprep.subr.mxu0 %v254
    %1048 = vmatpush1.msra.mxu0 %v253
    %1049 = vmatprep.subr.mxu0 %v258
    %1050 = vmatpush1.msra.mxu0 %v257
    %1051 = vmatprep.subr.mxu0 %v262
    %1052 = vmatpush1.msra.mxu0 %v261
    %1053 = vmatprep.subr.mxu0 %v266
    %1054 = vmatpush1.msra.mxu0 %v265
    %1055 = vmatprep.subr.mxu0 %v270
    %1056 = vmatpush1.msra.mxu0 %v269
    %1057 = vmatprep.subr.mxu0 %v274
    %1058 = vmatpush1.msra.mxu0 %v273
    %1059 = vmatprep.subr.mxu0 %v278
    %1060 = vmatpush1.msra.mxu0 %v277
    %1061 = vmatprep.subr.mxu0 %v282
    %1062 = vmatpush1.msra.mxu0 %v281
    %1063 = vmatprep.subr.mxu0 %v286
    %1064 = vmatpush1.msra.mxu0 %v285
    %1065 = vmatprep.subr.mxu0 %v290
    %1066 = vmatpush1.msra.mxu0 %v289
    %1067 = vmatprep.subr.mxu0 %v294
    %1068 = vmatpush1.msra.mxu0 %v293
    %1069 = vmatprep.subr.mxu0 %v298
    %1070 = vmatpush1.msra.mxu0 %v297
    %1071 = vmatprep.subr.mxu0 %v302
    %1072 = vmatpush1.msra.mxu0 %v301
    %1073 = vmatprep.subr.mxu0 %v306
    %1074 = vmatpush1.msra.mxu0 %v305
    %1075 = vmatprep.subr.mxu0 0.0
    %1076 = vmatpush1.msra.mxu0 0.0
    %1077 = vmatprep.subr.mxu0 0.0
    %1078 = vmatpush1.msra.mxu0 0.0
    %1079 = vmatprep.subr.mxu0 0.0
    %1080 = vmatpush1.msra.mxu0 0.0
    %1081 = vmatprep.subr.mxu0 0.0
    %1082 = vmatpush1.msra.mxu0 0.0
    %1083 = vmatprep.subr.mxu0 0.0
    %1084 = vmatpush1.msra.mxu0 0.0
    %1085 = vmatprep.subr.mxu0 0.0
    %1086 = vmatpush1.msra.mxu0 0.0
    %1087 = vmatprep.subr.mxu0 0.0
    %1088 = vmatpush1.msra.mxu0 0.0
    %1089 = vmatprep.subr.mxu0 0.0
    %1090 = vmatpush1.msra.mxu0 0.0
    %1091 = vmatprep.subr.mxu0 0.0
    %1092 = vmatpush1.msra.mxu0 0.0
    %1093 = vmatprep.subr.mxu0 0.0
    %1094 = vmatpush1.msra.mxu0 0.0
    %1095 = vmatprep.subr.mxu0 0.0
    %1096 = vmatpush1.msra.mxu0 0.0
    %1097 = vmatprep.subr.mxu0 0.0
    %1098 = vmatpush1.msra.mxu0 0.0
    %1099 = vmatprep.subr.mxu0 0.0
    %1100 = vmatpush1.msra.mxu0 0.0
    %1101 = vmatprep.subr.mxu0 0.0
    %1102 = vmatpush1.msra.mxu0 0.0
    %1103 = vmatprep.subr.mxu0 0.0
    %1104 = vmatpush1.msra.mxu0 0.0
    %1105 = vmatprep.subr.mxu0 0.0
    %1106 = vmatpush1.msra.mxu0 0.0
    %1107 = vmatprep.mubr.f32.mxu0 0.0
    %1108 = vmatmul.mubr.f32.gmra.mrb[0].mxu0 %v1041
    %v1109 = vpop.f32.mrb[0].mxu0
    %v1110 = vadd.f32 0.0, %v1109
    %v1111 = vpop.f32.mrb[0].mxu0
    %v1112 = vadd.f32 0.0, %v1111
    %1113 = vdwg.mxu0
    %1114 = vmatprep.subr.mxu0 %v248
    %1115 = vmatpush1.msra.mxu0 %v247
    %1116 = vmatprep.subr.mxu0 %v252
    %1117 = vmatpush1.msra.mxu0 %v251
    %1118 = vmatprep.subr.mxu0 %v256
    %1119 = vmatpush1.msra.mxu0 %v255
    %1120 = vmatprep.subr.mxu0 %v260
    %1121 = vmatpush1.msra.mxu0 %v259
    %1122 = vmatprep.subr.mxu0 %v264
    %1123 = vmatpush1.msra.mxu0 %v263
    %1124 = vmatprep.subr.mxu0 %v268
    %1125 = vmatpush1.msra.mxu0 %v267
    %1126 = vmatprep.subr.mxu0 %v272
    %1127 = vmatpush1.msra.mxu0 %v271
    %1128 = vmatprep.subr.mxu0 %v276
    %1129 = vmatpush1.msra.mxu0 %v275
    %1130 = vmatprep.subr.mxu0 %v280
    %1131 = vmatpush1.msra.mxu0 %v279
    %1132 = vmatprep.subr.mxu0 %v284
    %1133 = vmatpush1.msra.mxu0 %v283
    %1134 = vmatprep.subr.mxu0 %v288
    %1135 = vmatpush1.msra.mxu0 %v287
    %1136 = vmatprep.subr.mxu0 %v292
    %1137 = vmatpush1.msra.mxu0 %v291
    %1138 = vmatprep.subr.mxu0 %v296
    %1139 = vmatpush1.msra.mxu0 %v295
    %1140 = vmatprep.subr.mxu0 %v300
    %1141 = vmatpush1.msra.mxu0 %v299
    %1142 = vmatprep.subr.mxu0 %v304
    %1143 = vmatpush1.msra.mxu0 %v303
    %1144 = vmatprep.subr.mxu0 %v308
    %1145 = vmatpush1.msra.mxu0 %v307
    %1146 = vmatprep.subr.mxu0 0.0
    %1147 = vmatpush1.msra.mxu0 0.0
    %1148 = vmatprep.subr.mxu0 0.0
    %1149 = vmatpush1.msra.mxu0 0.0
    %1150 = vmatprep.subr.mxu0 0.0
    %1151 = vmatpush1.msra.mxu0 0.0
    %1152 = vmatprep.subr.mxu0 0.0
    %1153 = vmatpush1.msra.mxu0 0.0
    %1154 = vmatprep.subr.mxu0 0.0
    %1155 = vmatpush1.msra.mxu0 0.0
    %1156 = vmatprep.subr.mxu0 0.0
    %1157 = vmatpush1.msra.mxu0 0.0
    %1158 = vmatprep.subr.mxu0 0.0
    %1159 = vmatpush1.msra.mxu0 0.0
    %1160 = vmatprep.subr.mxu0 0.0
    %1161 = vmatpush1.msra.mxu0 0.0
    %1162 = vmatprep.subr.mxu0 0.0
    %1163 = vmatpush1.msra.mxu0 0.0
    %1164 = vmatprep.subr.mxu0 0.0
    %1165 = vmatpush1.msra.mxu0 0.0
    %1166 = vmatprep.subr.mxu0 0.0
    %1167 = vmatpush1.msra.mxu0 0.0
    %1168 = vmatprep.subr.mxu0 0.0
    %1169 = vmatpush1.msra.mxu0 0.0
    %1170 = vmatprep.subr.mxu0 0.0
    %1171 = vmatpush1.msra.mxu0 0.0
    %1172 = vmatprep.subr.mxu0 0.0
    %1173 = vmatpush1.msra.mxu0 0.0
    %1174 = vmatprep.subr.mxu0 0.0
    %1175 = vmatpush1.msra.mxu0 0.0
    %1176 = vmatprep.subr.mxu0 0.0
    %1177 = vmatpush1.msra.mxu0 0.0
    %1178 = vmatprep.mubr.f32.mxu0 0.0
    %1179 = vmatmul.mubr.f32.gmra.mrb[0].mxu0 %v1041
    %v1180 = vpop.f32.mrb[0].mxu0
    %v1181 = vadd.f32 0.0, %v1180
    %v1182 = vpop.f32.mrb[0].mxu0
    %v1183 = vadd.f32 0.0, %v1182
    %1184 = vdwg.mxu0
    %v1189 = vrot.slane %v1110, 4
    %v1190 = vrot.slane %v1112, 4
    %v1191 = vrot.slane %v1181, 4
    %v1192 = vrot.slane %v1183, 4
    %v1197 = vadd.f32 %v170, %v1189
    %v1198 = vadd.f32 %v172, %v1190
    %v1199 = vadd.f32 %v241, %v1191
    %v1200 = vadd.f32 %v243, %v1192
    %v1201 = vxor.u32 %v1197, 2147483648
    %v1202 = vxor.u32 %v1198, 2147483648
    %v1203 = vxor.u32 %v1200, 2147483648
    %v1204 = vmul.f32 %v1201, 1.442695
    %v1205 = vpow.pop %v1204
    %v1206 = vmul.f32 %v1202, 1.442695
    %v1207 = vpow.pop %v1206
    %v1208 = vmul.f32 %v1203, 1.442695
    %v1209 = vpow.pop %v1208
    %v1210 = vadd.f32 %v1205, 1.0
    %v1211 = vadd.f32 %v1207, 1.0
    %v1212 = vadd.f32 %v1209, 1.0
    %v1213 = vrcp.pop %v1210
    %v1214 = vmul.f32 1.0, %v1213
    %v1215 = vrcp.pop %v1211
    %v1216 = vmul.f32 1.0, %v1215
    %v1217 = vrcp.pop %v1212
    %v1218 = vmul.f32 1.0, %v1217
    %v1219 = vtanh.pop %v1199
    %v1221 = vrot.slane %v1037, 7
    %v1223 = vmul.f32 %v1216, %v1221
    %v1224 = vmul.f32 %v1214, %v1219
    %v1225 = vadd.f32 %v1223, %v1224
    %v1226 = vtanh.pop %v1225
    %v1227 = vmul.f32 %v1218, %v1226
    %v1229 = vrot.slane %v1227, 4
    %1231 = vmatprep.subr.mxu0 %v246
    %1232 = vmatpush1.msra.mxu0 %v245
    %1233 = vmatprep.subr.mxu0 %v250
    %1234 = vmatpush1.msra.mxu0 %v249
    %1235 = vmatprep.subr.mxu0 %v254
    %1236 = vmatpush1.msra.mxu0 %v253
    %1237 = vmatprep.subr.mxu0 %v258
    %1238 = vmatpush1.msra.mxu0 %v257
    %1239 = vmatprep.subr.mxu0 %v262
    %1240 = vmatpush1.msra.mxu0 %v261
    %1241 = vmatprep.subr.mxu0 %v266
    %1242 = vmatpush1.msra.mxu0 %v265
    %1243 = vmatprep.subr.mxu0 %v270
    %1244 = vmatpush1.msra.mxu0 %v269
    %1245 = vmatprep.subr.mxu0 %v274
    %1246 = vmatpush1.msra.mxu0 %v273
    %1247 = vmatprep.subr.mxu0 %v278
    %1248 = vmatpush1.msra.mxu0 %v277
    %1249 = vmatprep.subr.mxu0 %v282
    %1250 = vmatpush1.msra.mxu0 %v281
    %1251 = vmatprep.subr.mxu0 %v286
    %1252 = vmatpush1.msra.mxu0 %v285
    %1253 = vmatprep.subr.mxu0 %v290
    %1254 = vmatpush1.msra.mxu0 %v289
    %1255 = vmatprep.subr.mxu0 %v294
    %1256 = vmatpush1.msra.mxu0 %v293
    %1257 = vmatprep.subr.mxu0 %v298
    %1258 = vmatpush1.msra.mxu0 %v297
    %1259 = vmatprep.subr.mxu0 %v302
    %1260 = vmatpush1.msra.mxu0 %v301
    %1261 = vmatprep.subr.mxu0 %v306
    %1262 = vmatpush1.msra.mxu0 %v305
    %1263 = vmatprep.subr.mxu0 0.0
    %1264 = vmatpush1.msra.mxu0 0.0
    %1265 = vmatprep.subr.mxu0 0.0
    %1266 = vmatpush1.msra.mxu0 0.0
    %1267 = vmatprep.subr.mxu0 0.0
    %1268 = vmatpush1.msra.mxu0 0.0
    %1269 = vmatprep.subr.mxu0 0.0
    %1270 = vmatpush1.msra.mxu0 0.0
    %1271 = vmatprep.subr.mxu0 0.0
    %1272 = vmatpush1.msra.mxu0 0.0
    %1273 = vmatprep.subr.mxu0 0.0
    %1274 = vmatpush1.msra.mxu0 0.0
    %1275 = vmatprep.subr.mxu0 0.0
    %1276 = vmatpush1.msra.mxu0 0.0
    %1277 = vmatprep.subr.mxu0 0.0
    %1278 = vmatpush1.msra.mxu0 0.0
    %1279 = vmatprep.subr.mxu0 0.0
    %1280 = vmatpush1.msra.mxu0 0.0
    %1281 = vmatprep.subr.mxu0 0.0
    %1282 = vmatpush1.msra.mxu0 0.0
    %1283 = vmatprep.subr.mxu0 0.0
    %1284 = vmatpush1.msra.mxu0 0.0
    %1285 = vmatprep.subr.mxu0 0.0
    %1286 = vmatpush1.msra.mxu0 0.0
    %1287 = vmatprep.subr.mxu0 0.0
    %1288 = vmatpush1.msra.mxu0 0.0
    %1289 = vmatprep.subr.mxu0 0.0
    %1290 = vmatpush1.msra.mxu0 0.0
    %1291 = vmatprep.subr.mxu0 0.0
    %1292 = vmatpush1.msra.mxu0 0.0
    %1293 = vmatprep.subr.mxu0 0.0
    %1294 = vmatpush1.msra.mxu0 0.0
    %1295 = vmatprep.mubr.f32.mxu0 0.0
    %1296 = vmatmul.mubr.f32.gmra.mrb[0].mxu0 %v1229
    %v1297 = vpop.f32.mrb[0].mxu0
    %v1298 = vadd.f32 0.0, %v1297
    %v1299 = vpop.f32.mrb[0].mxu0
    %v1300 = vadd.f32 0.0, %v1299
    %1301 = vdwg.mxu0
    %1302 = vmatprep.subr.mxu0 %v248
    %1303 = vmatpush1.msra.mxu0 %v247
    %1304 = vmatprep.subr.mxu0 %v252
    %1305 = vmatpush1.msra.mxu0 %v251
    %1306 = vmatprep.subr.mxu0 %v256
    %1307 = vmatpush1.msra.mxu0 %v255
    %1308 = vmatprep.subr.mxu0 %v260
    %1309 = vmatpush1.msra.mxu0 %v259
    %1310 = vmatprep.subr.mxu0 %v264
    %1311 = vmatpush1.msra.mxu0 %v263
    %1312 = vmatprep.subr.mxu0 %v268
    %1313 = vmatpush1.msra.mxu0 %v267
    %1314 = vmatprep.subr.mxu0 %v272
    %1315 = vmatpush1.msra.mxu0 %v271
    %1316 = vmatprep.subr.mxu0 %v276
    %1317 = vmatpush1.msra.mxu0 %v275
    %1318 = vmatprep.subr.mxu0 %v280
    %1319 = vmatpush1.msra.mxu0 %v279
    %1320 = vmatprep.subr.mxu0 %v284
    %1321 = vmatpush1.msra.mxu0 %v283
    %1322 = vmatprep.subr.mxu0 %v288
    %1323 = vmatpush1.msra.mxu0 %v287
    %1324 = vmatprep.subr.mxu0 %v292
    %1325 = vmatpush1.msra.mxu0 %v291
    %1326 = vmatprep.subr.mxu0 %v296
    %1327 = vmatpush1.msra.mxu0 %v295
    %1328 = vmatprep.subr.mxu0 %v300
    %1329 = vmatpush1.msra.mxu0 %v299
    %1330 = vmatprep.subr.mxu0 %v304
    %1331 = vmatpush1.msra.mxu0 %v303
    %1332 = vmatprep.subr.mxu0 %v308
    %1333 = vmatpush1.msra.mxu0 %v307
    %1334 = vmatprep.subr.mxu0 0.0
    %1335 = vmatpush1.msra.mxu0 0.0
    %1336 = vmatprep.subr.mxu0 0.0
    %1337 = vmatpush1.msra.mxu0 0.0
    %1338 = vmatprep.subr.mxu0 0.0
    %1339 = vmatpush1.msra.mxu0 0.0
    %1340 = vmatprep.subr.mxu0 0.0
    %1341 = vmatpush1.msra.mxu0 0.0
    %1342 = vmatprep.subr.mxu0 0.0
    %1343 = vmatpush1.msra.mxu0 0.0
    %1344 = vmatprep.subr.mxu0 0.0
    %1345 = vmatpush1.msra.mxu0 0.0
    %1346 = vmatprep.subr.mxu0 0.0
    %1347 = vmatpush1.msra.mxu0 0.0
    %1348 = vmatprep.subr.mxu0 0.0
    %1349 = vmatpush1.msra.mxu0 0.0
    %1350 = vmatprep.subr.mxu0 0.0
    %1351 = vmatpush1.msra.mxu0 0.0
    %1352 = vmatprep.subr.mxu0 0.0
    %1353 = vmatpush1.msra.mxu0 0.0
    %1354 = vmatprep.subr.mxu0 0.0
    %1355 = vmatpush1.msra.mxu0 0.0
    %1356 = vmatprep.subr.mxu0 0.0
    %1357 = vmatpush1.msra.mxu0 0.0
    %1358 = vmatprep.subr.mxu0 0.0
    %1359 = vmatpush1.msra.mxu0 0.0
    %1360 = vmatprep.subr.mxu0 0.0
    %1361 = vmatpush1.msra.mxu0 0.0
    %1362 = vmatprep.subr.mxu0 0.0
    %1363 = vmatpush1.msra.mxu0 0.0
    %1364 = vmatprep.subr.mxu0 0.0
    %1365 = vmatpush1.msra.mxu0 0.0
    %1366 = vmatprep.mubr.f32.mxu0 0.0
    %1367 = vmatmul.mubr.f32.gmra.mrb[0].mxu0 %v1229
    %v1368 = vpop.f32.mrb[0].mxu0
    %v1369 = vadd.f32 0.0, %v1368
    %v1370 = vpop.f32.mrb[0].mxu0
    %v1371 = vadd.f32 0.0, %v1370
    %1372 = vdwg.mxu0
    %v1377 = vrot.slane %v1298, 3
    %v1378 = vrot.slane %v1300, 3
    %v1379 = vrot.slane %v1369, 3
    %v1380 = vrot.slane %v1371, 3
    %v1385 = vadd.f32 %v170, %v1377
    %v1386 = vadd.f32 %v172, %v1378
    %v1387 = vadd.f32 %v241, %v1379
    %v1388 = vadd.f32 %v243, %v1380
    %v1389 = vxor.u32 %v1385, 2147483648
    %v1390 = vxor.u32 %v1386, 2147483648
    %v1391 = vxor.u32 %v1388, 2147483648
    %v1392 = vmul.f32 %v1389, 1.442695
    %v1393 = vpow.pop %v1392
    %v1394 = vmul.f32 %v1390, 1.442695
    %v1395 = vpow.pop %v1394
    %v1396 = vmul.f32 %v1391, 1.442695
    %v1397 = vpow.pop %v1396
    %v1398 = vadd.f32 %v1393, 1.0
    %v1399 = vadd.f32 %v1395, 1.0
    %v1400 = vadd.f32 %v1397, 1.0
    %v1401 = vrcp.pop %v1398
    %v1402 = vmul.f32 1.0, %v1401
    %v1403 = vrcp.pop %v1399
    %v1404 = vmul.f32 1.0, %v1403
    %v1405 = vrcp.pop %v1400
    %v1406 = vmul.f32 1.0, %v1405
    %v1407 = vtanh.pop %v1387
    %v1409 = vrot.slane %v1225, 7
    %v1411 = vmul.f32 %v1404, %v1409
    %v1412 = vmul.f32 %v1402, %v1407
    %v1413 = vadd.f32 %v1411, %v1412
    %v1414 = vtanh.pop %v1413
    %v1415 = vmul.f32 %v1406, %v1414
    %v1417 = vrot.slane %v1415, 5
    %1419 = vmatprep.subr.mxu0 %v246
    %1420 = vmatpush1.msra.mxu0 %v245
    %1421 = vmatprep.subr.mxu0 %v250
    %1422 = vmatpush1.msra.mxu0 %v249
    %1423 = vmatprep.subr.mxu0 %v254
    %1424 = vmatpush1.msra.mxu0 %v253
    %1425 = vmatprep.subr.mxu0 %v258
    %1426 = vmatpush1.msra.mxu0 %v257
    %1427 = vmatprep.subr.mxu0 %v262
    %1428 = vmatpush1.msra.mxu0 %v261
    %1429 = vmatprep.subr.mxu0 %v266
    %1430 = vmatpush1.msra.mxu0 %v265
    %1431 = vmatprep.subr.mxu0 %v270
    %1432 = vmatpush1.msra.mxu0 %v269
    %1433 = vmatprep.subr.mxu0 %v274
    %1434 = vmatpush1.msra.mxu0 %v273
    %1435 = vmatprep.subr.mxu0 %v278
    %1436 = vmatpush1.msra.mxu0 %v277
    %1437 = vmatprep.subr.mxu0 %v282
    %1438 = vmatpush1.msra.mxu0 %v281
    %1439 = vmatprep.subr.mxu0 %v286
    %1440 = vmatpush1.msra.mxu0 %v285
    %1441 = vmatprep.subr.mxu0 %v290
    %1442 = vmatpush1.msra.mxu0 %v289
    %1443 = vmatprep.subr.mxu0 %v294
    %1444 = vmatpush1.msra.mxu0 %v293
    %1445 = vmatprep.subr.mxu0 %v298
    %1446 = vmatpush1.msra.mxu0 %v297
    %1447 = vmatprep.subr.mxu0 %v302
    %1448 = vmatpush1.msra.mxu0 %v301
    %1449 = vmatprep.subr.mxu0 %v306
    %1450 = vmatpush1.msra.mxu0 %v305
    %1451 = vmatprep.subr.mxu0 0.0
    %1452 = vmatpush1.msra.mxu0 0.0
    %1453 = vmatprep.subr.mxu0 0.0
    %1454 = vmatpush1.msra.mxu0 0.0
    %1455 = vmatprep.subr.mxu0 0.0
    %1456 = vmatpush1.msra.mxu0 0.0
    %1457 = vmatprep.subr.mxu0 0.0
    %1458 = vmatpush1.msra.mxu0 0.0
    %1459 = vmatprep.subr.mxu0 0.0
    %1460 = vmatpush1.msra.mxu0 0.0
    %1461 = vmatprep.subr.mxu0 0.0
    %1462 = vmatpush1.msra.mxu0 0.0
    %1463 = vmatprep.subr.mxu0 0.0
    %1464 = vmatpush1.msra.mxu0 0.0
    %1465 = vmatprep.subr.mxu0 0.0
    %1466 = vmatpush1.msra.mxu0 0.0
    %1467 = vmatprep.subr.mxu0 0.0
    %1468 = vmatpush1.msra.mxu0 0.0
    %1469 = vmatprep.subr.mxu0 0.0
    %1470 = vmatpush1.msra.mxu0 0.0
    %1471 = vmatprep.subr.mxu0 0.0
    %1472 = vmatpush1.msra.mxu0 0.0
    %1473 = vmatprep.subr.mxu0 0.0
    %1474 = vmatpush1.msra.mxu0 0.0
    %1475 = vmatprep.subr.mxu0 0.0
    %1476 = vmatpush1.msra.mxu0 0.0
    %1477 = vmatprep.subr.mxu0 0.0
    %1478 = vmatpush1.msra.mxu0 0.0
    %1479 = vmatprep.subr.mxu0 0.0
    %1480 = vmatpush1.msra.mxu0 0.0
    %1481 = vmatprep.subr.mxu0 0.0
    %1482 = vmatpush1.msra.mxu0 0.0
    %1483 = vmatprep.mubr.f32.mxu0 0.0
    %1484 = vmatmul.mubr.f32.gmra.mrb[0].mxu0 %v1417
    %v1485 = vpop.f32.mrb[0].mxu0
    %v1486 = vadd.f32 0.0, %v1485
    %v1487 = vpop.f32.mrb[0].mxu0
    %v1488 = vadd.f32 0.0, %v1487
    %1489 = vdwg.mxu0
    %1490 = vmatprep.subr.mxu0 %v248
    %1491 = vmatpush1.msra.mxu0 %v247
    %1492 = vmatprep.subr.mxu0 %v252
    %1493 = vmatpush1.msra.mxu0 %v251
    %1494 = vmatprep.subr.mxu0 %v256
    %1495 = vmatpush1.msra.mxu0 %v255
    %1496 = vmatprep.subr.mxu0 %v260
    %1497 = vmatpush1.msra.mxu0 %v259
    %1498 = vmatprep.subr.mxu0 %v264
    %1499 = vmatpush1.msra.mxu0 %v263
    %1500 = vmatprep.subr.mxu0 %v268
    %1501 = vmatpush1.msra.mxu0 %v267
    %1502 = vmatprep.subr.mxu0 %v272
    %1503 = vmatpush1.msra.mxu0 %v271
    %1504 = vmatprep.subr.mxu0 %v276
    %1505 = vmatpush1.msra.mxu0 %v275
    %1506 = vmatprep.subr.mxu0 %v280
    %1507 = vmatpush1.msra.mxu0 %v279
    %1508 = vmatprep.subr.mxu0 %v284
    %1509 = vmatpush1.msra.mxu0 %v283
    %1510 = vmatprep.subr.mxu0 %v288
    %1511 = vmatpush1.msra.mxu0 %v287
    %1512 = vmatprep.subr.mxu0 %v292
    %1513 = vmatpush1.msra.mxu0 %v291
    %1514 = vmatprep.subr.mxu0 %v296
    %1515 = vmatpush1.msra.mxu0 %v295
    %1516 = vmatprep.subr.mxu0 %v300
    %1517 = vmatpush1.msra.mxu0 %v299
    %1518 = vmatprep.subr.mxu0 %v304
    %1519 = vmatpush1.msra.mxu0 %v303
    %1520 = vmatprep.subr.mxu0 %v308
    %1521 = vmatpush1.msra.mxu0 %v307
    %1522 = vmatprep.subr.mxu0 0.0
    %1523 = vmatpush1.msra.mxu0 0.0
    %1524 = vmatprep.subr.mxu0 0.0
    %1525 = vmatpush1.msra.mxu0 0.0
    %1526 = vmatprep.subr.mxu0 0.0
    %1527 = vmatpush1.msra.mxu0 0.0
    %1528 = vmatprep.subr.mxu0 0.0
    %1529 = vmatpush1.msra.mxu0 0.0
    %1530 = vmatprep.subr.mxu0 0.0
    %1531 = vmatpush1.msra.mxu0 0.0
    %1532 = vmatprep.subr.mxu0 0.0
    %1533 = vmatpush1.msra.mxu0 0.0
    %1534 = vmatprep.subr.mxu0 0.0
    %1535 = vmatpush1.msra.mxu0 0.0
    %1536 = vmatprep.subr.mxu0 0.0
    %1537 = vmatpush1.msra.mxu0 0.0
    %1538 = vmatprep.subr.mxu0 0.0
    %1539 = vmatpush1.msra.mxu0 0.0
    %1540 = vmatprep.subr.mxu0 0.0
    %1541 = vmatpush1.msra.mxu0 0.0
    %1542 = vmatprep.subr.mxu0 0.0
    %1543 = vmatpush1.msra.mxu0 0.0
    %1544 = vmatprep.subr.mxu0 0.0
    %1545 = vmatpush1.msra.mxu0 0.0
    %1546 = vmatprep.subr.mxu0 0.0
    %1547 = vmatpush1.msra.mxu0 0.0
    %1548 = vmatprep.subr.mxu0 0.0
    %1549 = vmatpush1.msra.mxu0 0.0
    %1550 = vmatprep.subr.mxu0 0.0
    %1551 = vmatpush1.msra.mxu0 0.0
    %1552 = vmatprep.subr.mxu0 0.0
    %1553 = vmatpush1.msra.mxu0 0.0
    %1554 = vmatprep.mubr.f32.mxu0 0.0
    %1555 = vmatmul.mubr.f32.gmra.mrb[0].mxu0 %v1417
    %v1556 = vpop.f32.mrb[0].mxu0
    %v1557 = vadd.f32 0.0, %v1556
    %v1558 = vpop.f32.mrb[0].mxu0
    %v1559 = vadd.f32 0.0, %v1558
    %1560 = vdwg.mxu0
    %v1565 = vrot.slane %v1486, 2
    %v1566 = vrot.slane %v1488, 2
    %v1567 = vrot.slane %v1557, 2
    %v1568 = vrot.slane %v1559, 2
    %v1573 = vadd.f32 %v170, %v1565
    %v1574 = vadd.f32 %v172, %v1566
    %v1575 = vadd.f32 %v241, %v1567
    %v1576 = vadd.f32 %v243, %v1568
    %v1577 = vxor.u32 %v1573, 2147483648
    %v1578 = vxor.u32 %v1574, 2147483648
    %v1579 = vxor.u32 %v1576, 2147483648
    %v1580 = vmul.f32 %v1577, 1.442695
    %v1581 = vpow.pop %v1580
    %v1582 = vmul.f32 %v1578, 1.442695
    %v1583 = vpow.pop %v1582
    %v1584 = vmul.f32 %v1579, 1.442695
    %v1585 = vpow.pop %v1584
    %v1586 = vadd.f32 %v1581, 1.0
    %v1587 = vadd.f32 %v1583, 1.0
    %v1588 = vadd.f32 %v1585, 1.0
    %v1589 = vrcp.pop %v1586
    %v1590 = vmul.f32 1.0, %v1589
    %v1591 = vrcp.pop %v1587
    %v1592 = vmul.f32 1.0, %v1591
    %v1593 = vrcp.pop %v1588
    %v1594 = vmul.f32 1.0, %v1593
    %v1595 = vtanh.pop %v1575
    %v1597 = vrot.slane %v1413, 7
    %v1599 = vmul.f32 %v1592, %v1597
    %v1600 = vmul.f32 %v1590, %v1595
    %v1601 = vadd.f32 %v1599, %v1600
    %v1602 = vtanh.pop %v1601
    %v1603 = vmul.f32 %v1594, %v1602
    %v1605 = vrot.slane %v1603, 6
    %1607 = vmatprep.subr.mxu0 %v246
    %1608 = vmatpush1.msra.mxu0 %v245
    %1609 = vmatprep.subr.mxu0 %v250
    %1610 = vmatpush1.msra.mxu0 %v249
    %1611 = vmatprep.subr.mxu0 %v254
    %1612 = vmatpush1.msra.mxu0 %v253
    %1613 = vmatprep.subr.mxu0 %v258
    %1614 = vmatpush1.msra.mxu0 %v257
    %1615 = vmatprep.subr.mxu0 %v262
    %1616 = vmatpush1.msra.mxu0 %v261
    %1617 = vmatprep.subr.mxu0 %v266
    %1618 = vmatpush1.msra.mxu0 %v265
    %1619 = vmatprep.subr.mxu0 %v270
    %1620 = vmatpush1.msra.mxu0 %v269
    %1621 = vmatprep.subr.mxu0 %v274
    %1622 = vmatpush1.msra.mxu0 %v273
    %1623 = vmatprep.subr.mxu0 %v278
    %1624 = vmatpush1.msra.mxu0 %v277
    %1625 = vmatprep.subr.mxu0 %v282
    %1626 = vmatpush1.msra.mxu0 %v281
    %1627 = vmatprep.subr.mxu0 %v286
    %1628 = vmatpush1.msra.mxu0 %v285
    %1629 = vmatprep.subr.mxu0 %v290
    %1630 = vmatpush1.msra.mxu0 %v289
    %1631 = vmatprep.subr.mxu0 %v294
    %1632 = vmatpush1.msra.mxu0 %v293
    %1633 = vmatprep.subr.mxu0 %v298
    %1634 = vmatpush1.msra.mxu0 %v297
    %1635 = vmatprep.subr.mxu0 %v302
    %1636 = vmatpush1.msra.mxu0 %v301
    %1637 = vmatprep.subr.mxu0 %v306
    %1638 = vmatpush1.msra.mxu0 %v305
    %1639 = vmatprep.subr.mxu0 0.0
    %1640 = vmatpush1.msra.mxu0 0.0
    %1641 = vmatprep.subr.mxu0 0.0
    %1642 = vmatpush1.msra.mxu0 0.0
    %1643 = vmatprep.subr.mxu0 0.0
    %1644 = vmatpush1.msra.mxu0 0.0
    %1645 = vmatprep.subr.mxu0 0.0
    %1646 = vmatpush1.msra.mxu0 0.0
    %1647 = vmatprep.subr.mxu0 0.0
    %1648 = vmatpush1.msra.mxu0 0.0
    %1649 = vmatprep.subr.mxu0 0.0
    %1650 = vmatpush1.msra.mxu0 0.0
    %1651 = vmatprep.subr.mxu0 0.0
    %1652 = vmatpush1.msra.mxu0 0.0
    %1653 = vmatprep.subr.mxu0 0.0
    %1654 = vmatpush1.msra.mxu0 0.0
    %1655 = vmatprep.subr.mxu0 0.0
    %1656 = vmatpush1.msra.mxu0 0.0
    %1657 = vmatprep.subr.mxu0 0.0
    %1658 = vmatpush1.msra.mxu0 0.0
    %1659 = vmatprep.subr.mxu0 0.0
    %1660 = vmatpush1.msra.mxu0 0.0
    %1661 = vmatprep.subr.mxu0 0.0
    %1662 = vmatpush1.msra.mxu0 0.0
    %1663 = vmatprep.subr.mxu0 0.0
    %1664 = vmatpush1.msra.mxu0 0.0
    %1665 = vmatprep.subr.mxu0 0.0
    %1666 = vmatpush1.msra.mxu0 0.0
    %1667 = vmatprep.subr.mxu0 0.0
    %1668 = vmatpush1.msra.mxu0 0.0
    %1669 = vmatprep.subr.mxu0 0.0
    %1670 = vmatpush1.msra.mxu0 0.0
    %1671 = vmatprep.mubr.f32.mxu0 0.0
    %1672 = vmatmul.mubr.f32.gmra.mrb[0].mxu0 %v1605
    %v1673 = vpop.f32.mrb[0].mxu0
    %v1674 = vadd.f32 0.0, %v1673
    %v1675 = vpop.f32.mrb[0].mxu0
    %v1676 = vadd.f32 0.0, %v1675
    %1677 = vdwg.mxu0
    %1678 = vmatprep.subr.mxu0 %v248
    %1679 = vmatpush1.msra.mxu0 %v247
    %1680 = vmatprep.subr.mxu0 %v252
    %1681 = vmatpush1.msra.mxu0 %v251
    %1682 = vmatprep.subr.mxu0 %v256
    %1683 = vmatpush1.msra.mxu0 %v255
    %1684 = vmatprep.subr.mxu0 %v260
    %1685 = vmatpush1.msra.mxu0 %v259
    %1686 = vmatprep.subr.mxu0 %v264
    %1687 = vmatpush1.msra.mxu0 %v263
    %1688 = vmatprep.subr.mxu0 %v268
    %1689 = vmatpush1.msra.mxu0 %v267
    %1690 = vmatprep.subr.mxu0 %v272
    %1691 = vmatpush1.msra.mxu0 %v271
    %1692 = vmatprep.subr.mxu0 %v276
    %1693 = vmatpush1.msra.mxu0 %v275
    %1694 = vmatprep.subr.mxu0 %v280
    %1695 = vmatpush1.msra.mxu0 %v279
    %1696 = vmatprep.subr.mxu0 %v284
    %1697 = vmatpush1.msra.mxu0 %v283
    %1698 = vmatprep.subr.mxu0 %v288
    %1699 = vmatpush1.msra.mxu0 %v287
    %1700 = vmatprep.subr.mxu0 %v292
    %1701 = vmatpush1.msra.mxu0 %v291
    %1702 = vmatprep.subr.mxu0 %v296
    %1703 = vmatpush1.msra.mxu0 %v295
    %1704 = vmatprep.subr.mxu0 %v300
    %1705 = vmatpush1.msra.mxu0 %v299
    %1706 = vmatprep.subr.mxu0 %v304
    %1707 = vmatpush1.msra.mxu0 %v303
    %1708 = vmatprep.subr.mxu0 %v308
    %1709 = vmatpush1.msra.mxu0 %v307
    %1710 = vmatprep.subr.mxu0 0.0
    %1711 = vmatpush1.msra.mxu0 0.0
    %1712 = vmatprep.subr.mxu0 0.0
    %1713 = vmatpush1.msra.mxu0 0.0
    %1714 = vmatprep.subr.mxu0 0.0
    %1715 = vmatpush1.msra.mxu0 0.0
    %1716 = vmatprep.subr.mxu0 0.0
    %1717 = vmatpush1.msra.mxu0 0.0
    %1718 = vmatprep.subr.mxu0 0.0
    %1719 = vmatpush1.msra.mxu0 0.0
    %1720 = vmatprep.subr.mxu0 0.0
    %1721 = vmatpush1.msra.mxu0 0.0
    %1722 = vmatprep.subr.mxu0 0.0
    %1723 = vmatpush1.msra.mxu0 0.0
    %1724 = vmatprep.subr.mxu0 0.0
    %1725 = vmatpush1.msra.mxu0 0.0
    %1726 = vmatprep.subr.mxu0 0.0
    %1727 = vmatpush1.msra.mxu0 0.0
    %1728 = vmatprep.subr.mxu0 0.0
    %1729 = vmatpush1.msra.mxu0 0.0
    %1730 = vmatprep.subr.mxu0 0.0
    %1731 = vmatpush1.msra.mxu0 0.0
    %1732 = vmatprep.subr.mxu0 0.0
    %1733 = vmatpush1.msra.mxu0 0.0
    %1734 = vmatprep.subr.mxu0 0.0
    %1735 = vmatpush1.msra.mxu0 0.0
    %1736 = vmatprep.subr.mxu0 0.0
    %1737 = vmatpush1.msra.mxu0 0.0
    %1738 = vmatprep.subr.mxu0 0.0
    %1739 = vmatpush1.msra.mxu0 0.0
    %1740 = vmatprep.subr.mxu0 0.0
    %1741 = vmatpush1.msra.mxu0 0.0
    %1742 = vmatprep.mubr.f32.mxu0 0.0
    %1743 = vmatmul.mubr.f32.gmra.mrb[0].mxu0 %v1605
    %v1744 = vpop.f32.mrb[0].mxu0
    %v1745 = vadd.f32 0.0, %v1744
    %v1746 = vpop.f32.mrb[0].mxu0
    %v1747 = vadd.f32 0.0, %v1746
    %1748 = vdwg.mxu0
    %v1753 = vrot.slane %v1674, 1
    %v1754 = vrot.slane %v1676, 1
    %v1755 = vrot.slane %v1745, 1
    %v1756 = vrot.slane %v1747, 1
    %v1761 = vadd.f32 %v170, %v1753
    %v1762 = vadd.f32 %v172, %v1754
    %v1763 = vadd.f32 %v241, %v1755
    %v1764 = vadd.f32 %v243, %v1756
    %v1765 = vxor.u32 %v1761, 2147483648
    %v1766 = vxor.u32 %v1762, 2147483648
    %v1767 = vxor.u32 %v1764, 2147483648
    %v1768 = vmul.f32 %v1765, 1.442695
    %v1769 = vpow.pop %v1768
    %v1770 = vmul.f32 %v1766, 1.442695
    %v1771 = vpow.pop %v1770
    %v1772 = vmul.f32 %v1767, 1.442695
    %v1773 = vpow.pop %v1772
    %v1774 = vadd.f32 %v1769, 1.0
    %v1775 = vadd.f32 %v1771, 1.0
    %v1776 = vadd.f32 %v1773, 1.0
    %v1777 = vrcp.pop %v1774
    %v1778 = vmul.f32 1.0, %v1777
    %v1779 = vrcp.pop %v1775
    %v1780 = vmul.f32 1.0, %v1779
    %v1781 = vrcp.pop %v1776
    %v1782 = vmul.f32 1.0, %v1781
    %v1783 = vtanh.pop %v1763
    %v1785 = vrot.slane %v1601, 7
    %v1787 = vmul.f32 %v1780, %v1785
    %v1788 = vmul.f32 %v1778, %v1783
    %v1789 = vadd.f32 %v1787, %v1788
    %v1790 = vtanh.pop %v1789
    %v1791 = vmul.f32 %v1782, %v1790
    %v1793 = vcombine.high %v1791, %v1791
    %v1795 = vunpack.c.l.s4 1966171168
    %v1796 = vunpack.c.0.s8 %v1795
    %v1797 = vlaneseq
    %v1798 = vshrl.u32 %v1797, 7
    %v1799 = vsub.s32 %v1796, %v1798
    %v1800 = vrot.slane %v1793, %v1799
    %v1801 = vcombine.high %v1800, %v1800
    %v1803 = vunpack.c.l.s4 1966171168
    %v1804 = vunpack.c.0.s8 %v1803
    %v1805 = vlaneseq
    %v1806 = vshrl.u32 %v1805, 7
    %v1807 = vsub.s32 %v1804, %v1806
    %v1808 = vrot.slane %v1801, %v1807
    %v1809 = vcombine.high %v1808, %v1808
    %v1811 = vlaneseq
    %vm1812 = vcmp.ge.s32.totalorder %v1811, 0
    %vm1813 = vcmp.lt.s32.totalorder %v1811, 128
    %vm1814 = vmand %vm1812, %vm1813
    %1815 = vst.msk [vmem:[#allocation8] sm:$0x1] %vm1814, %v1809
    %v1816 = vld [vmem:[%s1] sm:$0x1]
    %vm1817 = vcmp.lt.s32.totalorder %v1811, 16
    %vm1818 = vmand %vm1812, %vm1817
    %1819 = vst.msk [vmem:[#allocation8 + $0x1] sm:$0x1] %vm1818, %v1816
    // Predicated region
    $region34: #{tpu_custom_call.1} parent=1 // pred_check
      _
    $region35: #{tpu_custom_call.1} parent=1 // pred_check_branch
      %1821 = sbr.rel (0) target = $region37
    $region36: #{tpu_custom_call.1} parent=1 // pred_region
      %s1823 = ssub.s32 32, 32
      %1824 = vsyncadd [#allocation4], %s1823
      %s1826 = sshll.u32 [#allocation8], 4
      %s1827 = int_to_ptr.vmem [resolvable:$true] %s1826
      %1829 = dma.vmem_to_hbm [thread:$0]  %s1827, 32, %s5, [#allocation4]
    $region37: #{tpu_custom_call.1} parent=1 // pred_fallthru
      _
    // Predicated region
    $region38: #{tpu_custom_call.1} parent=1 // pred_check
      _
    $region39: #{tpu_custom_call.1} parent=1 // pred_check_branch
      %1831 = sbr.rel (0) target = $region41
    $region40: #{tpu_custom_call.1} parent=1 // pred_region
      %1832 = dma.done [#allocation4], 32
    $region41: #{tpu_custom_call.1} parent=1 // pred_fallthru
      _
    %1833 = vsyncpa [#allocation3], 1
    %1834 = vsyncpa [#allocation6], 1
    %1835 = vsyncpa [#allocation4], 1

</llo_original>
